<compile_context>
chip_gen: v5e
topology: v5e:2x2
jax: 0.10.0
libtpu: 0.0.40
codegen_flags: <defaults>
</compile_context>

<pallas_src>
import functools

import jax
import jax.numpy as jnp
from jax.experimental import pallas as pl
from jax.experimental.pallas import tpu as pltpu


# ----------------------------------------------------------------------------
# Small ViT config (miniature vit_base_patch16_224)
# ----------------------------------------------------------------------------
BATCH = 2
IN_CH = 3
IMG = 16
PATCH = 8
N_PATCH = (IMG // PATCH) ** 2          # 4
SEQ = N_PATCH + 1                      # 5 (cls token + patches)
SEQ_PAD = 8                            # padded to one sublane tile
DIM = 32
HEADS = 4
HEAD_DIM = DIM // HEADS                # 8
DEPTH = 2
MLP_DIM = 4 * DIM                      # 128
LN_EPS = 1e-6
PATCH_FLAT = IN_CH * PATCH * PATCH     # 192

assert SEQ_PAD & (SEQ_PAD - 1) == 0 and SEQ_PAD >= SEQ
_SEQ_SHIFT = SEQ_PAD.bit_length() - 1


# ----------------------------------------------------------------------------
# Packed-slab layouts (shared by wrapper packing and in-kernel static slices)
# ----------------------------------------------------------------------------
W_COLS = 128   # bf16 matmul-weight slab width
V_COLS = 128   # f32 vector slab width


def _w_layout():
    lay = [("patch_w", PATCH_FLAT, DIM)]
    for d in range(DEPTH):
        lay += [(f"qkv_w{d}", DIM, 3 * DIM), (f"proj_w{d}", DIM, DIM),
                (f"fc1_w{d}", DIM, MLP_DIM), (f"fc2_w{d}", MLP_DIM, DIM)]
    return lay


def _v_layout():
    lay = [("embed", SEQ_PAD, DIM), ("norm_g", 1, DIM), ("norm_b", 1, DIM)]
    for d in range(DEPTH):
        lay += [(f"ln1_g{d}", 1, DIM), (f"ln1_b{d}", 1, DIM),
                (f"qkv_b{d}", 1, 3 * DIM), (f"proj_b{d}", 1, DIM),
                (f"ln2_g{d}", 1, DIM), (f"ln2_b{d}", 1, DIM),
                (f"fc1_b{d}", 1, MLP_DIM), (f"fc2_b{d}", 1, DIM)]
    return lay


def _offsets(layout):
    off, r = {}, 0
    for name, nr, nc in layout:
        off[name] = (r, nr, nc)
        r += nr
    return off, r


W_OFF, W_ROWS = _offsets(_w_layout())   # 192 + DEPTH*(32+32+32+128) rows
V_OFF, V_ROWS = _offsets(_v_layout())


# ----------------------------------------------------------------------------
# Fused encoder kernel: the whole ViT forward for a (2*B)-image batch.
# All refs are full arrays resident in VMEM (no grid, no intermediate HBM).
# ----------------------------------------------------------------------------
def _vit_encoder_kernel(patches_ref, wslab_ref, vslab_ref, o_ref):
    bf = jnp.bfloat16
    f32 = jnp.float32
    m = patches_ref.shape[0]                  # (2B) * SEQ_PAD token rows
    batch2 = m // SEQ_PAD
    scale = 1.0 / float(HEAD_DIM) ** 0.5

    def w(name):                              # bf16 weight slab slice
        r0, nr, nc = W_OFF[name]
        return wslab_ref[r0:r0 + nr, 0:nc]

    def v(name):                              # f32 vector slab slice
        r0, nr, nc = V_OFF[name]
        return vslab_ref[r0:r0 + nr, 0:nc]

    def layernorm(x, g, b):
        mu = jnp.mean(x, axis=-1, keepdims=True)
        xc = x - mu
        var = jnp.mean(xc * xc, axis=-1, keepdims=True)
        return xc * jax.lax.rsqrt(var + LN_EPS) * g + b

    def gelu(x):
        # tanh-approx GELU; torch nn.GELU default is exact erf-GELU.
        # TODO(synk): exact erf-based GELU if bit-level parity is required.
        c = jnp.float32(0.7978845608028654)   # sqrt(2/pi)
        return 0.5 * x * (1.0 + jnp.tanh(c * (x + 0.044715 * x * x * x)))

    # Additive attention mask (built once, reused by every block/head):
    # 0 where key belongs to the same image AND is a real (non-pad) token,
    # -1e30 otherwise.  Lets one (m,m) matmul cover all images per head.
    row = jax.lax.broadcasted_iota(jnp.int32, (m, m), 0)
    col = jax.lax.broadcasted_iota(jnp.int32, (m, m), 1)
    same_img = (row >> _SEQ_SHIFT) == (col >> _SEQ_SHIFT)
    real_key = (col & (SEQ_PAD - 1)) < SEQ
    attn_bias = jnp.where(jnp.logical_and(same_img, real_key),
                          jnp.float32(0.0), jnp.float32(-1e30))

    # --- patch-embed projection + additive embedding (cls/pos/patch_b folded)
    x = jnp.dot(patches_ref[...], w("patch_w"),
                preferred_element_type=f32)                       # (m, D) f32
    x = (x.reshape(batch2, SEQ_PAD, DIM)
         + v("embed").reshape(1, SEQ_PAD, DIM)).reshape(m, DIM)

    for d in range(DEPTH):
        # ---------------- attention branch ----------------
        h = layernorm(x, v(f"ln1_g{d}"), v(f"ln1_b{d}"))
        qkv = jnp.dot(h.astype(bf), w(f"qkv_w{d}"),
                      preferred_element_type=f32) + v(f"qkv_b{d}")   # (m, 3D)

        ctx_parts = []
        for hh in range(HEADS):
            lo = hh * HEAD_DIM
            q_h = qkv[:, lo:lo + HEAD_DIM].astype(bf)                # (m, 8)
            k_h = qkv[:, DIM + lo:DIM + lo + HEAD_DIM].astype(bf)    # (m, 8)
            v_h = qkv[:, 2 * DIM + lo:2 * DIM + lo + HEAD_DIM].astype(bf)
            # scores for ALL images at once: (m,8)@(8,m) with block-diag mask
            s = jax.lax.dot_general(q_h, k_h, (((1,), (1,)), ((), ())),
                                    preferred_element_type=f32)
            s = s * scale + attn_bias
            s = s - jnp.max(s, axis=-1, keepdims=True)
            p = jnp.exp(s)
            p = p * pl.reciprocal(jnp.sum(p, axis=-1, keepdims=True),
                                  approx=True)
            ctx_parts.append(jnp.dot(p.astype(bf), v_h,
                                     preferred_element_type=f32))    # (m, 8)
        # single K=32 output projection instead of 4 K=8 matmuls
        ctx = jnp.concatenate(ctx_parts, axis=-1).astype(bf)         # (m, D)
        x = x + jnp.dot(ctx, w(f"proj_w{d}"),
                        preferred_element_type=f32) + v(f"proj_b{d}")

        # ---------------- MLP branch ----------------
        h2 = layernorm(x, v(f"ln2_g{d}"), v(f"ln2_b{d}"))
        h2 = gelu(jnp.dot(h2.astype(bf), w(f"fc1_w{d}"),
                          preferred_element_type=f32) + v(f"fc1_b{d}"))
        x = x + jnp.dot(h2.astype(bf), w(f"fc2_w{d}"),
                        preferred_element_type=f32) + v(f"fc2_b{d}")

    # Final LN on CLS rows only (LN is row-wise => identical to norm-then-slice)
    cls_rows = x.reshape(batch2, SEQ_PAD, DIM)[:, 0, :]               # (2B, D)
    o_ref[...] = layernorm(cls_rows, v("norm_g"), v("norm_b")).astype(o_ref.dtype)


# ----------------------------------------------------------------------------
# JAX glue: patch extraction, slab packing, wrapper around the one kernel
# ----------------------------------------------------------------------------
def _extract_patches(x):
    """NCHW image -> (B, N_PATCH, C*P*P) flattened conv(k=P, s=P) patches."""
    B, C, H, W = x.shape
    nh, nw = H // PATCH, W // PATCH
    p = x.reshape(B, C, nh, PATCH, nw, PATCH)
    p = p.transpose(0, 2, 4, 1, 3, 5)                # (B, nh, nw, C, P, P)
    return p.reshape(B, nh * nw, C * PATCH * PATCH)


def _pack_w_slab(params):
    slab = jnp.zeros((W_ROWS, W_COLS), jnp.float32)

    def put(s, name, val):
        r0, nr, nc = W_OFF[name]
        return s.at[r0:r0 + nr, 0:nc].set(
            jnp.asarray(val, jnp.float32).reshape(nr, nc))

    slab = put(slab, "patch_w", params["patch_w"].T)   # (CPP, DIM)
    for d, bp in enumerate(params["blocks"]):
        for key in ("qkv_w", "proj_w", "fc1_w", "fc2_w"):
            slab = put(slab, f"{key}{d}", bp[key])
    return slab.astype(jnp.bfloat16)


def _pack_v_slab(params):
    slab = jnp.zeros((V_ROWS, V_COLS), jnp.float32)

    def put(s, name, val):
        r0, nr, nc = V_OFF[name]
        return s.at[r0:r0 + nr, 0:nc].set(
            jnp.asarray(val, jnp.float32).reshape(nr, nc))

    # Additive embedding: row0 = cls_token + pos[0] (no patch_b: cls row is a
    # zero patch), rows 1..N = pos[i] + patch_b, pad rows = 0.
    pos = params["pos_embed"].reshape(SEQ, DIM)
    embed = jnp.zeros((SEQ_PAD, DIM), jnp.float32)
    embed = embed.at[0].set(pos[0] + params["cls_token"].reshape(DIM))
    embed = embed.at[1:SEQ].set(pos[1:] + params["patch_b"].reshape(1, DIM))

    slab = put(slab, "embed", embed)
    slab = put(slab, "norm_g", params["norm_g"])
    slab = put(slab, "norm_b", params["norm_b"])
    for d, bp in enumerate(params["blocks"]):
        for key in ("ln1_g", "ln1_b", "qkv_b", "proj_b",
                    "ln2_g", "ln2_b", "fc1_b", "fc2_b"):
            slab = put(slab, f"{key}{d}", bp[key])
    return slab


def _cost_estimate(m):
    per_block = (2 * m * DIM * 3 * DIM                       # qkv
                 + HEADS * 2 * (2 * m * m * HEAD_DIM)        # scores + context
                 + 2 * m * DIM * DIM                         # out projection
                 + 2 * 2 * m * DIM * MLP_DIM)                # mlp fc1 + fc2
    flops = 2 * m * PATCH_FLAT * DIM + DEPTH * per_block
    transcendentals = DEPTH * (HEADS * m * m + m * MLP_DIM) + (2 * DEPTH + 1) * m
    bytes_accessed = (m * PATCH_FLAT * 2 + W_ROWS * W_COLS * 2
                      + V_ROWS * V_COLS * 4 + (m // SEQ_PAD) * DIM * 4)
    return pl.CostEstimate(flops=flops, transcendentals=transcendentals,
                           bytes_accessed=bytes_accessed)


def encode_both(params, imgs):
    """imgs: (2B, C, H, W) -> CLS features (2B, DIM) via one fused kernel."""
    batch2 = imgs.shape[0]
    m = batch2 * SEQ_PAD

    # Token rows per image: [zero cls row, patch rows, zero pad rows].
    patches = _extract_patches(imgs)                              # (2B, N, CPP)
    tok = jnp.zeros((batch2, SEQ_PAD, PATCH_FLAT), jnp.float32)
    tok = tok.at[:, 1:1 + N_PATCH, :].set(patches)
    patches_bf = tok.reshape(m, PATCH_FLAT).astype(jnp.bfloat16)  # (m, CPP)

    wslab = _pack_w_slab(params)                                  # (W_ROWS,128) bf16
    vslab = _pack_v_slab(params)                                  # (V_ROWS,128) f32

    vmem = pl.BlockSpec(memory_space=pltpu.MemorySpace.VMEM)
    # TODO(synk): for v7x, a size-2 "parallel" grid axis (one image per
    # TensorCore) and per-block weight streaming are needed once scaled to the
    # real vit_base checkpoint; at this toy size a single fused call is fastest.
    return pl.pallas_call(
        _vit_encoder_kernel,
        out_shape=jax.ShapeDtypeStruct((batch2, DIM), jnp.float32),
        in_specs=[vmem, vmem, vmem],
        out_specs=vmem,
        cost_estimate=_cost_estimate(m),
    )(patches_bf, wslab, vslab)


def vit_feat(params, input1, input2):
    B = input1.shape[0]
    imgs = jnp.concatenate([input1, input2], axis=0)             # (2B, C, H, W)
    feats = encode_both(params, imgs)                            # (2B, DIM)
    return jnp.concatenate([feats[:B], feats[B:]], axis=1)       # (B, 2*DIM)


# ----------------------------------------------------------------------------
# Parameter init (deterministic, synthetic)
# ----------------------------------------------------------------------------
def init_params(key):
    def nrm(k, shape):
        return (0.02 * jax.random.normal(k, shape)).astype(jnp.float32)

    keys = jax.random.split(key, 4 + DEPTH)
    params = {
        "cls_token": nrm(keys[0], (1, 1, DIM)),
        "pos_embed": nrm(keys[1], (1, SEQ, DIM)),
        # patch-embed conv (D, C, P, P) flattened; applied as patches @ W.T
        "patch_w": nrm(keys[2], (DIM, PATCH_FLAT)),
        "patch_b": jnp.zeros((DIM,), jnp.float32),
        "norm_g": jnp.ones((DIM,), jnp.float32),
        "norm_b": jnp.zeros((DIM,), jnp.float32),
        "blocks": [],
    }
    for d in range(DEPTH):
        bk = jax.random.split(keys[4 + d], 4)
        params["blocks"].append({
            "ln1_g": jnp.ones((DIM,), jnp.float32),
            "ln1_b": jnp.zeros((DIM,), jnp.float32),
            "qkv_w": nrm(bk[0], (DIM, 3 * DIM)),
            "qkv_b": jnp.zeros((3 * DIM,), jnp.float32),
            "proj_w": nrm(bk[1], (DIM, DIM)),
            "proj_b": jnp.zeros((DIM,), jnp.float32),
            "ln2_g": jnp.ones((DIM,), jnp.float32),
            "ln2_b": jnp.zeros((DIM,), jnp.float32),
            "fc1_w": nrm(bk[2], (DIM, MLP_DIM)),
            "fc1_b": jnp.zeros((MLP_DIM,), jnp.float32),
            "fc2_w": nrm(bk[3], (MLP_DIM, DIM)),
            "fc2_b": jnp.zeros((DIM,), jnp.float32),
        })
    return params


# ----------------------------------------------------------------------------
# Main
# ----------------------------------------------------------------------------
if __name__ == "__main__":
    key = jax.random.PRNGKey(0)
    k_img1, k_img2, k_par = jax.random.split(key, 3)

    img1 = jax.random.normal(k_img1, (BATCH, IN_CH, IMG, IMG), jnp.float32)
    img2 = jax.random.normal(k_img2, (BATCH, IN_CH, IMG, IMG), jnp.float32)
    params = init_params(k_par)

    fwd = jax.jit(functools.partial(vit_feat, params))
    out = jax.block_until_ready(fwd(img1, img2))

    assert out.shape == (BATCH, 2 * DIM), out.shape
    assert bool(jnp.all(jnp.isfinite(out)))
    print("KERNEL_OK")
</pallas_src>

<mosaic_0001>
module attributes {stable_mosaic.version = 11 : i64} {
  func.func @_vit_encoder_kernel(%arg0: memref<32x192xbf16, #tpu.memory_space<vmem>>, %arg1: memref<640x128xbf16, #tpu.memory_space<vmem>>, %arg2: memref<26x128xf32, #tpu.memory_space<vmem>>, %arg3: memref<4x32xf32, #tpu.memory_space<vmem>>) attributes {dimension_semantics = [], scalar_prefetch = 0 : i64, scratch_operands = 0 : i64, tpu.core_type = #tpu.core_type<tc>} {
    %0 = tpu.iota {dimensions = array<i32: 0>} : vector<32x32xi32>
    %1 = tpu.iota {dimensions = array<i32: 1>} : vector<32x32xi32>
    %c3_i32 = arith.constant 3 : i32
    %2 = vector.broadcast %c3_i32 : i32 to vector<32x32xi32>
    %3 = arith.shrsi %0, %2 : vector<32x32xi32>
    %c3_i32_0 = arith.constant 3 : i32
    %4 = vector.broadcast %c3_i32_0 : i32 to vector<32x32xi32>
    %5 = arith.shrsi %1, %4 : vector<32x32xi32>
    %6 = arith.cmpi eq, %3, %5 : vector<32x32xi32>
    %c7_i32 = arith.constant 7 : i32
    %7 = vector.broadcast %c7_i32 : i32 to vector<32x32xi32>
    %8 = arith.andi %1, %7 : vector<32x32xi32>
    %c5_i32 = arith.constant 5 : i32
    %9 = vector.broadcast %c5_i32 : i32 to vector<32x32xi32>
    %10 = arith.cmpi slt, %8, %9 : vector<32x32xi32>
    %11 = arith.andi %6, %10 : vector<32x32xi1>
    %cst = arith.constant 0.000000e+00 : f32
    %cst_1 = arith.constant -1.000000e+30 : f32
    %12 = vector.broadcast %cst : f32 to vector<32x32xf32>
    %13 = vector.broadcast %cst_1 : f32 to vector<32x32xf32>
    %14 = arith.select %11, %12, %13 : vector<32x32xi1>, vector<32x32xf32>
    %c0 = arith.constant 0 : index
    %c0_2 = arith.constant 0 : index
    %15 = vector.load %arg0[%c0, %c0_2] : memref<32x192xbf16, #tpu.memory_space<vmem>>, vector<32x192xbf16>
    %c0_3 = arith.constant 0 : index
    %c0_4 = arith.constant 0 : index
    %16 = vector.load %arg1[%c0_3, %c0_4] : memref<640x128xbf16, #tpu.memory_space<vmem>>, vector<192x32xbf16>
    %cst_5 = arith.constant dense<0.000000e+00> : vector<32x32xf32>
    %17 = tpu.matmul %15, %16, %cst_5 {dimension_numbers = #tpu.dot_dimension_numbers<[1], [0], [0], [1], [0, 0, 1, 1], [], []>} : vector<32x192xbf16>, vector<192x32xbf16>, vector<32x32xf32> -> vector<32x32xf32>
    %18 = vector.shape_cast %17 : vector<32x32xf32> to vector<4x8x32xf32>
    %c0_6 = arith.constant 0 : index
    %c0_7 = arith.constant 0 : index
    %19 = vector.load %arg2[%c0_6, %c0_7] : memref<26x128xf32, #tpu.memory_space<vmem>>, vector<8x32xf32>
    %20 = vector.shape_cast %19 : vector<8x32xf32> to vector<1x8x32xf32>
    %21 = vector.broadcast %20 : vector<1x8x32xf32> to vector<4x8x32xf32>
    %22 = arith.addf %18, %21 : vector<4x8x32xf32>
    %23 = vector.shape_cast %22 : vector<4x8x32xf32> to vector<32x32xf32>
    %c10 = arith.constant 10 : index
    %c0_8 = arith.constant 0 : index
    %24 = vector.load %arg2[%c10, %c0_8] : memref<26x128xf32, #tpu.memory_space<vmem>>, vector<1x32xf32>
    %c11 = arith.constant 11 : index
    %c0_9 = arith.constant 0 : index
    %25 = vector.load %arg2[%c11, %c0_9] : memref<26x128xf32, #tpu.memory_space<vmem>>, vector<1x32xf32>
    %cst_10 = arith.constant dense<0.000000e+00> : vector<32xf32>
    %26 = vector.multi_reduction <add>, %23, %cst_10 [1] : vector<32x32xf32> to vector<32xf32>
    %27 = vector.shape_cast %26 : vector<32xf32> to vector<32x1xf32>
    %cst_11 = arith.constant 3.200000e+01 : f32
    %28 = vector.broadcast %cst_11 : f32 to vector<32x1xf32>
    %29 = arith.divf %27, %28 : vector<32x1xf32>
    %30 = vector.broadcast %29 : vector<32x1xf32> to vector<32x32xf32>
    %31 = arith.subf %23, %30 : vector<32x32xf32>
    %32 = arith.mulf %31, %31 : vector<32x32xf32>
    %cst_12 = arith.constant dense<0.000000e+00> : vector<32xf32>
    %33 = vector.multi_reduction <add>, %32, %cst_12 [1] : vector<32x32xf32> to vector<32xf32>
    %34 = vector.shape_cast %33 : vector<32xf32> to vector<32x1xf32>
    %cst_13 = arith.constant 3.200000e+01 : f32
    %35 = vector.broadcast %cst_13 : f32 to vector<32x1xf32>
    %36 = arith.divf %34, %35 : vector<32x1xf32>
    %cst_14 = arith.constant 9.99999997E-7 : f32
    %37 = vector.broadcast %cst_14 : f32 to vector<32x1xf32>
    %38 = arith.addf %36, %37 : vector<32x1xf32>
    %39 = math.rsqrt %38 : vector<32x1xf32>
    %40 = vector.broadcast %39 : vector<32x1xf32> to vector<32x32xf32>
    %41 = arith.mulf %31, %40 : vector<32x32xf32>
    %42 = vector.broadcast %24 : vector<1x32xf32> to vector<32x32xf32>
    %43 = arith.mulf %41, %42 : vector<32x32xf32>
    %44 = vector.broadcast %25 : vector<1x32xf32> to vector<32x32xf32>
    %45 = arith.addf %43, %44 : vector<32x32xf32>
    %46 = arith.truncf %45 : vector<32x32xf32> to vector<32x32xbf16>
    %c192 = arith.constant 192 : index
    %c0_15 = arith.constant 0 : index
    %47 = vector.load %arg1[%c192, %c0_15] : memref<640x128xbf16, #tpu.memory_space<vmem>>, vector<32x96xbf16>
    %cst_16 = arith.constant dense<0.000000e+00> : vector<32x96xf32>
    %48 = tpu.matmul %46, %47, %cst_16 {dimension_numbers = #tpu.dot_dimension_numbers<[1], [0], [0], [1], [0, 0, 1, 1], [], []>} : vector<32x32xbf16>, vector<32x96xbf16>, vector<32x96xf32> -> vector<32x96xf32>
    %c12 = arith.constant 12 : index
    %c0_17 = arith.constant 0 : index
    %49 = vector.load %arg2[%c12, %c0_17] : memref<26x128xf32, #tpu.memory_space<vmem>>, vector<1x96xf32>
    %50 = vector.broadcast %49 : vector<1x96xf32> to vector<32x96xf32>
    %51 = arith.addf %48, %50 : vector<32x96xf32>
    %52 = vector.extract_strided_slice %51 {offsets = [0, 0], sizes = [32, 8], strides = [1, 1]} : vector<32x96xf32> to vector<32x8xf32>
    %53 = arith.truncf %52 : vector<32x8xf32> to vector<32x8xbf16>
    %54 = vector.extract_strided_slice %51 {offsets = [0, 32], sizes = [32, 8], strides = [1, 1]} : vector<32x96xf32> to vector<32x8xf32>
    %55 = arith.truncf %54 : vector<32x8xf32> to vector<32x8xbf16>
    %56 = vector.extract_strided_slice %51 {offsets = [0, 64], sizes = [32, 8], strides = [1, 1]} : vector<32x96xf32> to vector<32x8xf32>
    %57 = arith.truncf %56 : vector<32x8xf32> to vector<32x8xbf16>
    %cst_18 = arith.constant dense<0.000000e+00> : vector<32x32xf32>
    %58 = tpu.matmul %53, %55, %cst_18 {dimension_numbers = #tpu.dot_dimension_numbers<[1], [1], [0], [0], [0, 0, 1, 0], [], []>} : vector<32x8xbf16>, vector<32x8xbf16>, vector<32x32xf32> -> vector<32x32xf32>
    %cst_19 = arith.constant 0.353553385 : f32
    %59 = vector.broadcast %cst_19 : f32 to vector<32x32xf32>
    %60 = arith.mulf %58, %59 : vector<32x32xf32>
    %61 = arith.addf %60, %14 : vector<32x32xf32>
    %cst_20 = arith.constant dense<0xFF800000> : vector<32xf32>
    %62 = vector.multi_reduction <maximumf>, %61, %cst_20 [1] : vector<32x32xf32> to vector<32xf32>
    %63 = vector.shape_cast %62 : vector<32xf32> to vector<32x1xf32>
    %64 = vector.broadcast %63 : vector<32x1xf32> to vector<32x32xf32>
    %65 = arith.subf %61, %64 : vector<32x32xf32>
    %66 = math.exp %65 : vector<32x32xf32>
    %cst_21 = arith.constant dense<0.000000e+00> : vector<32xf32>
    %67 = vector.multi_reduction <add>, %66, %cst_21 [1] : vector<32x32xf32> to vector<32xf32>
    %68 = vector.shape_cast %67 : vector<32xf32> to vector<32x1xf32>
    %69 = tpu.reciprocal %68 {approx = true} : vector<32x1xf32> -> vector<32x1xf32>
    %70 = vector.broadcast %69 : vector<32x1xf32> to vector<32x32xf32>
    %71 = arith.mulf %66, %70 : vector<32x32xf32>
    %72 = arith.truncf %71 : vector<32x32xf32> to vector<32x32xbf16>
    %cst_22 = arith.constant dense<0.000000e+00> : vector<32x8xf32>
    %73 = tpu.matmul %72, %57, %cst_22 {dimension_numbers = #tpu.dot_dimension_numbers<[1], [0], [0], [1], [0, 0, 1, 1], [], []>} : vector<32x32xbf16>, vector<32x8xbf16>, vector<32x8xf32> -> vector<32x8xf32>
    %74 = vector.extract_strided_slice %51 {offsets = [0, 8], sizes = [32, 8], strides = [1, 1]} : vector<32x96xf32> to vector<32x8xf32>
    %75 = arith.truncf %74 : vector<32x8xf32> to vector<32x8xbf16>
    %76 = vector.extract_strided_slice %51 {offsets = [0, 40], sizes = [32, 8], strides = [1, 1]} : vector<32x96xf32> to vector<32x8xf32>
    %77 = arith.truncf %76 : vector<32x8xf32> to vector<32x8xbf16>
    %78 = vector.extract_strided_slice %51 {offsets = [0, 72], sizes = [32, 8], strides = [1, 1]} : vector<32x96xf32> to vector<32x8xf32>
    %79 = arith.truncf %78 : vector<32x8xf32> to vector<32x8xbf16>
    %cst_23 = arith.constant dense<0.000000e+00> : vector<32x32xf32>
    %80 = tpu.matmul %75, %77, %cst_23 {dimension_numbers = #tpu.dot_dimension_numbers<[1], [1], [0], [0], [0, 0, 1, 0], [], []>} : vector<32x8xbf16>, vector<32x8xbf16>, vector<32x32xf32> -> vector<32x32xf32>
    %cst_24 = arith.constant 0.353553385 : f32
    %81 = vector.broadcast %cst_24 : f32 to vector<32x32xf32>
    %82 = arith.mulf %80, %81 : vector<32x32xf32>
    %83 = arith.addf %82, %14 : vector<32x32xf32>
    %cst_25 = arith.constant dense<0xFF800000> : vector<32xf32>
    %84 = vector.multi_reduction <maximumf>, %83, %cst_25 [1] : vector<32x32xf32> to vector<32xf32>
    %85 = vector.shape_cast %84 : vector<32xf32> to vector<32x1xf32>
    %86 = vector.broadcast %85 : vector<32x1xf32> to vector<32x32xf32>
    %87 = arith.subf %83, %86 : vector<32x32xf32>
    %88 = math.exp %87 : vector<32x32xf32>
    %cst_26 = arith.constant dense<0.000000e+00> : vector<32xf32>
    %89 = vector.multi_reduction <add>, %88, %cst_26 [1] : vector<32x32xf32> to vector<32xf32>
    %90 = vector.shape_cast %89 : vector<32xf32> to vector<32x1xf32>
    %91 = tpu.reciprocal %90 {approx = true} : vector<32x1xf32> -> vector<32x1xf32>
    %92 = vector.broadcast %91 : vector<32x1xf32> to vector<32x32xf32>
    %93 = arith.mulf %88, %92 : vector<32x32xf32>
    %94 = arith.truncf %93 : vector<32x32xf32> to vector<32x32xbf16>
    %cst_27 = arith.constant dense<0.000000e+00> : vector<32x8xf32>
    %95 = tpu.matmul %94, %79, %cst_27 {dimension_numbers = #tpu.dot_dimension_numbers<[1], [0], [0], [1], [0, 0, 1, 1], [], []>} : vector<32x32xbf16>, vector<32x8xbf16>, vector<32x8xf32> -> vector<32x8xf32>
    %96 = vector.extract_strided_slice %51 {offsets = [0, 16], sizes = [32, 8], strides = [1, 1]} : vector<32x96xf32> to vector<32x8xf32>
    %97 = arith.truncf %96 : vector<32x8xf32> to vector<32x8xbf16>
    %98 = vector.extract_strided_slice %51 {offsets = [0, 48], sizes = [32, 8], strides = [1, 1]} : vector<32x96xf32> to vector<32x8xf32>
    %99 = arith.truncf %98 : vector<32x8xf32> to vector<32x8xbf16>
    %100 = vector.extract_strided_slice %51 {offsets = [0, 80], sizes = [32, 8], strides = [1, 1]} : vector<32x96xf32> to vector<32x8xf32>
    %101 = arith.truncf %100 : vector<32x8xf32> to vector<32x8xbf16>
    %cst_28 = arith.constant dense<0.000000e+00> : vector<32x32xf32>
    %102 = tpu.matmul %97, %99, %cst_28 {dimension_numbers = #tpu.dot_dimension_numbers<[1], [1], [0], [0], [0, 0, 1, 0], [], []>} : vector<32x8xbf16>, vector<32x8xbf16>, vector<32x32xf32> -> vector<32x32xf32>
    %cst_29 = arith.constant 0.353553385 : f32
    %103 = vector.broadcast %cst_29 : f32 to vector<32x32xf32>
    %104 = arith.mulf %102, %103 : vector<32x32xf32>
    %105 = arith.addf %104, %14 : vector<32x32xf32>
    %cst_30 = arith.constant dense<0xFF800000> : vector<32xf32>
    %106 = vector.multi_reduction <maximumf>, %105, %cst_30 [1] : vector<32x32xf32> to vector<32xf32>
    %107 = vector.shape_cast %106 : vector<32xf32> to vector<32x1xf32>
    %108 = vector.broadcast %107 : vector<32x1xf32> to vector<32x32xf32>
    %109 = arith.subf %105, %108 : vector<32x32xf32>
    %110 = math.exp %109 : vector<32x32xf32>
    %cst_31 = arith.constant dense<0.000000e+00> : vector<32xf32>
    %111 = vector.multi_reduction <add>, %110, %cst_31 [1] : vector<32x32xf32> to vector<32xf32>
    %112 = vector.shape_cast %111 : vector<32xf32> to vector<32x1xf32>
    %113 = tpu.reciprocal %112 {approx = true} : vector<32x1xf32> -> vector<32x1xf32>
    %114 = vector.broadcast %113 : vector<32x1xf32> to vector<32x32xf32>
    %115 = arith.mulf %110, %114 : vector<32x32xf32>
    %116 = arith.truncf %115 : vector<32x32xf32> to vector<32x32xbf16>
    %cst_32 = arith.constant dense<0.000000e+00> : vector<32x8xf32>
    %117 = tpu.matmul %116, %101, %cst_32 {dimension_numbers = #tpu.dot_dimension_numbers<[1], [0], [0], [1], [0, 0, 1, 1], [], []>} : vector<32x32xbf16>, vector<32x8xbf16>, vector<32x8xf32> -> vector<32x8xf32>
    %118 = vector.extract_strided_slice %51 {offsets = [0, 24], sizes = [32, 8], strides = [1, 1]} : vector<32x96xf32> to vector<32x8xf32>
    %119 = arith.truncf %118 : vector<32x8xf32> to vector<32x8xbf16>
    %120 = vector.extract_strided_slice %51 {offsets = [0, 56], sizes = [32, 8], strides = [1, 1]} : vector<32x96xf32> to vector<32x8xf32>
    %121 = arith.truncf %120 : vector<32x8xf32> to vector<32x8xbf16>
    %122 = vector.extract_strided_slice %51 {offsets = [0, 88], sizes = [32, 8], strides = [1, 1]} : vector<32x96xf32> to vector<32x8xf32>
    %123 = arith.truncf %122 : vector<32x8xf32> to vector<32x8xbf16>
    %cst_33 = arith.constant dense<0.000000e+00> : vector<32x32xf32>
    %124 = tpu.matmul %119, %121, %cst_33 {dimension_numbers = #tpu.dot_dimension_numbers<[1], [1], [0], [0], [0, 0, 1, 0], [], []>} : vector<32x8xbf16>, vector<32x8xbf16>, vector<32x32xf32> -> vector<32x32xf32>
    %cst_34 = arith.constant 0.353553385 : f32
    %125 = vector.broadcast %cst_34 : f32 to vector<32x32xf32>
    %126 = arith.mulf %124, %125 : vector<32x32xf32>
    %127 = arith.addf %126, %14 : vector<32x32xf32>
    %cst_35 = arith.constant dense<0xFF800000> : vector<32xf32>
    %128 = vector.multi_reduction <maximumf>, %127, %cst_35 [1] : vector<32x32xf32> to vector<32xf32>
    %129 = vector.shape_cast %128 : vector<32xf32> to vector<32x1xf32>
    %130 = vector.broadcast %129 : vector<32x1xf32> to vector<32x32xf32>
    %131 = arith.subf %127, %130 : vector<32x32xf32>
    %132 = math.exp %131 : vector<32x32xf32>
    %cst_36 = arith.constant dense<0.000000e+00> : vector<32xf32>
    %133 = vector.multi_reduction <add>, %132, %cst_36 [1] : vector<32x32xf32> to vector<32xf32>
    %134 = vector.shape_cast %133 : vector<32xf32> to vector<32x1xf32>
    %135 = tpu.reciprocal %134 {approx = true} : vector<32x1xf32> -> vector<32x1xf32>
    %136 = vector.broadcast %135 : vector<32x1xf32> to vector<32x32xf32>
    %137 = arith.mulf %132, %136 : vector<32x32xf32>
    %138 = arith.truncf %137 : vector<32x32xf32> to vector<32x32xbf16>
    %cst_37 = arith.constant dense<0.000000e+00> : vector<32x8xf32>
    %139 = tpu.matmul %138, %123, %cst_37 {dimension_numbers = #tpu.dot_dimension_numbers<[1], [0], [0], [1], [0, 0, 1, 1], [], []>} : vector<32x32xbf16>, vector<32x8xbf16>, vector<32x8xf32> -> vector<32x8xf32>
    %140 = tpu.concatenate %73, %95, %117, %139 in 1 : vector<32x8xf32>, vector<32x8xf32>, vector<32x8xf32>, vector<32x8xf32> -> vector<32x32xf32>
    %141 = arith.truncf %140 : vector<32x32xf32> to vector<32x32xbf16>
    %c224 = arith.constant 224 : index
    %c0_38 = arith.constant 0 : index
    %142 = vector.load %arg1[%c224, %c0_38] : memref<640x128xbf16, #tpu.memory_space<vmem>>, vector<32x32xbf16>
    %cst_39 = arith.constant dense<0.000000e+00> : vector<32x32xf32>
    %143 = tpu.matmul %141, %142, %cst_39 {dimension_numbers = #tpu.dot_dimension_numbers<[1], [0], [0], [1], [0, 0, 1, 1], [], []>} : vector<32x32xbf16>, vector<32x32xbf16>, vector<32x32xf32> -> vector<32x32xf32>
    %144 = arith.addf %23, %143 : vector<32x32xf32>
    %c13 = arith.constant 13 : index
    %c0_40 = arith.constant 0 : index
    %145 = vector.load %arg2[%c13, %c0_40] : memref<26x128xf32, #tpu.memory_space<vmem>>, vector<1x32xf32>
    %146 = vector.broadcast %145 : vector<1x32xf32> to vector<32x32xf32>
    %147 = arith.addf %144, %146 : vector<32x32xf32>
    %c14 = arith.constant 14 : index
    %c0_41 = arith.constant 0 : index
    %148 = vector.load %arg2[%c14, %c0_41] : memref<26x128xf32, #tpu.memory_space<vmem>>, vector<1x32xf32>
    %c15 = arith.constant 15 : index
    %c0_42 = arith.constant 0 : index
    %149 = vector.load %arg2[%c15, %c0_42] : memref<26x128xf32, #tpu.memory_space<vmem>>, vector<1x32xf32>
    %cst_43 = arith.constant dense<0.000000e+00> : vector<32xf32>
    %150 = vector.multi_reduction <add>, %147, %cst_43 [1] : vector<32x32xf32> to vector<32xf32>
    %151 = vector.shape_cast %150 : vector<32xf32> to vector<32x1xf32>
    %cst_44 = arith.constant 3.200000e+01 : f32
    %152 = vector.broadcast %cst_44 : f32 to vector<32x1xf32>
    %153 = arith.divf %151, %152 : vector<32x1xf32>
    %154 = vector.broadcast %153 : vector<32x1xf32> to vector<32x32xf32>
    %155 = arith.subf %147, %154 : vector<32x32xf32>
    %156 = arith.mulf %155, %155 : vector<32x32xf32>
    %cst_45 = arith.constant dense<0.000000e+00> : vector<32xf32>
    %157 = vector.multi_reduction <add>, %156, %cst_45 [1] : vector<32x32xf32> to vector<32xf32>
    %158 = vector.shape_cast %157 : vector<32xf32> to vector<32x1xf32>
    %cst_46 = arith.constant 3.200000e+01 : f32
    %159 = vector.broadcast %cst_46 : f32 to vector<32x1xf32>
    %160 = arith.divf %158, %159 : vector<32x1xf32>
    %cst_47 = arith.constant 9.99999997E-7 : f32
    %161 = vector.broadcast %cst_47 : f32 to vector<32x1xf32>
    %162 = arith.addf %160, %161 : vector<32x1xf32>
    %163 = math.rsqrt %162 : vector<32x1xf32>
    %164 = vector.broadcast %163 : vector<32x1xf32> to vector<32x32xf32>
    %165 = arith.mulf %155, %164 : vector<32x32xf32>
    %166 = vector.broadcast %148 : vector<1x32xf32> to vector<32x32xf32>
    %167 = arith.mulf %165, %166 : vector<32x32xf32>
    %168 = vector.broadcast %149 : vector<1x32xf32> to vector<32x32xf32>
    %169 = arith.addf %167, %168 : vector<32x32xf32>
    %170 = arith.truncf %169 : vector<32x32xf32> to vector<32x32xbf16>
    %c256 = arith.constant 256 : index
    %c0_48 = arith.constant 0 : index
    %171 = vector.load %arg1[%c256, %c0_48] : memref<640x128xbf16, #tpu.memory_space<vmem>>, vector<32x128xbf16>
    %cst_49 = arith.constant dense<0.000000e+00> : vector<32x128xf32>
    %172 = tpu.matmul %170, %171, %cst_49 {dimension_numbers = #tpu.dot_dimension_numbers<[1], [0], [0], [1], [0, 0, 1, 1], [], []>} : vector<32x32xbf16>, vector<32x128xbf16>, vector<32x128xf32> -> vector<32x128xf32>
    %c16 = arith.constant 16 : index
    %c0_50 = arith.constant 0 : index
    %173 = vector.load %arg2[%c16, %c0_50] : memref<26x128xf32, #tpu.memory_space<vmem>>, vector<1x128xf32>
    %174 = vector.broadcast %173 : vector<1x128xf32> to vector<32x128xf32>
    %175 = arith.addf %172, %174 : vector<32x128xf32>
    %cst_51 = arith.constant 5.000000e-01 : f32
    %176 = vector.broadcast %cst_51 : f32 to vector<32x128xf32>
    %177 = arith.mulf %176, %175 : vector<32x128xf32>
    %cst_52 = arith.constant 4.471500e-02 : f32
    %178 = vector.broadcast %cst_52 : f32 to vector<32x128xf32>
    %179 = arith.mulf %178, %175 : vector<32x128xf32>
    %180 = arith.mulf %179, %175 : vector<32x128xf32>
    %181 = arith.mulf %180, %175 : vector<32x128xf32>
    %182 = arith.addf %175, %181 : vector<32x128xf32>
    %cst_53 = arith.constant 0.797884583 : f32
    %183 = vector.broadcast %cst_53 : f32 to vector<32x128xf32>
    %184 = arith.mulf %183, %182 : vector<32x128xf32>
    %185 = math.tanh %184 : vector<32x128xf32>
    %cst_54 = arith.constant 1.000000e+00 : f32
    %186 = vector.broadcast %cst_54 : f32 to vector<32x128xf32>
    %187 = arith.addf %186, %185 : vector<32x128xf32>
    %188 = arith.mulf %177, %187 : vector<32x128xf32>
    %189 = arith.truncf %188 : vector<32x128xf32> to vector<32x128xbf16>
    %c288 = arith.constant 288 : index
    %c0_55 = arith.constant 0 : index
    %190 = vector.load %arg1[%c288, %c0_55] : memref<640x128xbf16, #tpu.memory_space<vmem>>, vector<128x32xbf16>
    %cst_56 = arith.constant dense<0.000000e+00> : vector<32x32xf32>
    %191 = tpu.matmul %189, %190, %cst_56 {dimension_numbers = #tpu.dot_dimension_numbers<[1], [0], [0], [1], [0, 0, 1, 1], [], []>} : vector<32x128xbf16>, vector<128x32xbf16>, vector<32x32xf32> -> vector<32x32xf32>
    %192 = arith.addf %147, %191 : vector<32x32xf32>
    %c17 = arith.constant 17 : index
    %c0_57 = arith.constant 0 : index
    %193 = vector.load %arg2[%c17, %c0_57] : memref<26x128xf32, #tpu.memory_space<vmem>>, vector<1x32xf32>
    %194 = vector.broadcast %193 : vector<1x32xf32> to vector<32x32xf32>
    %195 = arith.addf %192, %194 : vector<32x32xf32>
    %c18 = arith.constant 18 : index
    %c0_58 = arith.constant 0 : index
    %196 = vector.load %arg2[%c18, %c0_58] : memref<26x128xf32, #tpu.memory_space<vmem>>, vector<1x32xf32>
    %c19 = arith.constant 19 : index
    %c0_59 = arith.constant 0 : index
    %197 = vector.load %arg2[%c19, %c0_59] : memref<26x128xf32, #tpu.memory_space<vmem>>, vector<1x32xf32>
    %cst_60 = arith.constant dense<0.000000e+00> : vector<32xf32>
    %198 = vector.multi_reduction <add>, %195, %cst_60 [1] : vector<32x32xf32> to vector<32xf32>
    %199 = vector.shape_cast %198 : vector<32xf32> to vector<32x1xf32>
    %cst_61 = arith.constant 3.200000e+01 : f32
    %200 = vector.broadcast %cst_61 : f32 to vector<32x1xf32>
    %201 = arith.divf %199, %200 : vector<32x1xf32>
    %202 = vector.broadcast %201 : vector<32x1xf32> to vector<32x32xf32>
    %203 = arith.subf %195, %202 : vector<32x32xf32>
    %204 = arith.mulf %203, %203 : vector<32x32xf32>
    %cst_62 = arith.constant dense<0.000000e+00> : vector<32xf32>
    %205 = vector.multi_reduction <add>, %204, %cst_62 [1] : vector<32x32xf32> to vector<32xf32>
    %206 = vector.shape_cast %205 : vector<32xf32> to vector<32x1xf32>
    %cst_63 = arith.constant 3.200000e+01 : f32
    %207 = vector.broadcast %cst_63 : f32 to vector<32x1xf32>
    %208 = arith.divf %206, %207 : vector<32x1xf32>
    %cst_64 = arith.constant 9.99999997E-7 : f32
    %209 = vector.broadcast %cst_64 : f32 to vector<32x1xf32>
    %210 = arith.addf %208, %209 : vector<32x1xf32>
    %211 = math.rsqrt %210 : vector<32x1xf32>
    %212 = vector.broadcast %211 : vector<32x1xf32> to vector<32x32xf32>
    %213 = arith.mulf %203, %212 : vector<32x32xf32>
    %214 = vector.broadcast %196 : vector<1x32xf32> to vector<32x32xf32>
    %215 = arith.mulf %213, %214 : vector<32x32xf32>
    %216 = vector.broadcast %197 : vector<1x32xf32> to vector<32x32xf32>
    %217 = arith.addf %215, %216 : vector<32x32xf32>
    %218 = arith.truncf %217 : vector<32x32xf32> to vector<32x32xbf16>
    %c416 = arith.constant 416 : index
    %c0_65 = arith.constant 0 : index
    %219 = vector.load %arg1[%c416, %c0_65] : memref<640x128xbf16, #tpu.memory_space<vmem>>, vector<32x96xbf16>
    %cst_66 = arith.constant dense<0.000000e+00> : vector<32x96xf32>
    %220 = tpu.matmul %218, %219, %cst_66 {dimension_numbers = #tpu.dot_dimension_numbers<[1], [0], [0], [1], [0, 0, 1, 1], [], []>} : vector<32x32xbf16>, vector<32x96xbf16>, vector<32x96xf32> -> vector<32x96xf32>
    %c20 = arith.constant 20 : index
    %c0_67 = arith.constant 0 : index
    %221 = vector.load %arg2[%c20, %c0_67] : memref<26x128xf32, #tpu.memory_space<vmem>>, vector<1x96xf32>
    %222 = vector.broadcast %221 : vector<1x96xf32> to vector<32x96xf32>
    %223 = arith.addf %220, %222 : vector<32x96xf32>
    %224 = vector.extract_strided_slice %223 {offsets = [0, 0], sizes = [32, 8], strides = [1, 1]} : vector<32x96xf32> to vector<32x8xf32>
    %225 = arith.truncf %224 : vector<32x8xf32> to vector<32x8xbf16>
    %226 = vector.extract_strided_slice %223 {offsets = [0, 32], sizes = [32, 8], strides = [1, 1]} : vector<32x96xf32> to vector<32x8xf32>
    %227 = arith.truncf %226 : vector<32x8xf32> to vector<32x8xbf16>
    %228 = vector.extract_strided_slice %223 {offsets = [0, 64], sizes = [32, 8], strides = [1, 1]} : vector<32x96xf32> to vector<32x8xf32>
    %229 = arith.truncf %228 : vector<32x8xf32> to vector<32x8xbf16>
    %cst_68 = arith.constant dense<0.000000e+00> : vector<32x32xf32>
    %230 = tpu.matmul %225, %227, %cst_68 {dimension_numbers = #tpu.dot_dimension_numbers<[1], [1], [0], [0], [0, 0, 1, 0], [], []>} : vector<32x8xbf16>, vector<32x8xbf16>, vector<32x32xf32> -> vector<32x32xf32>
    %cst_69 = arith.constant 0.353553385 : f32
    %231 = vector.broadcast %cst_69 : f32 to vector<32x32xf32>
    %232 = arith.mulf %230, %231 : vector<32x32xf32>
    %233 = arith.addf %232, %14 : vector<32x32xf32>
    %cst_70 = arith.constant dense<0xFF800000> : vector<32xf32>
    %234 = vector.multi_reduction <maximumf>, %233, %cst_70 [1] : vector<32x32xf32> to vector<32xf32>
    %235 = vector.shape_cast %234 : vector<32xf32> to vector<32x1xf32>
    %236 = vector.broadcast %235 : vector<32x1xf32> to vector<32x32xf32>
    %237 = arith.subf %233, %236 : vector<32x32xf32>
    %238 = math.exp %237 : vector<32x32xf32>
    %cst_71 = arith.constant dense<0.000000e+00> : vector<32xf32>
    %239 = vector.multi_reduction <add>, %238, %cst_71 [1] : vector<32x32xf32> to vector<32xf32>
    %240 = vector.shape_cast %239 : vector<32xf32> to vector<32x1xf32>
    %241 = tpu.reciprocal %240 {approx = true} : vector<32x1xf32> -> vector<32x1xf32>
    %242 = vector.broadcast %241 : vector<32x1xf32> to vector<32x32xf32>
    %243 = arith.mulf %238, %242 : vector<32x32xf32>
    %244 = arith.truncf %243 : vector<32x32xf32> to vector<32x32xbf16>
    %cst_72 = arith.constant dense<0.000000e+00> : vector<32x8xf32>
    %245 = tpu.matmul %244, %229, %cst_72 {dimension_numbers = #tpu.dot_dimension_numbers<[1], [0], [0], [1], [0, 0, 1, 1], [], []>} : vector<32x32xbf16>, vector<32x8xbf16>, vector<32x8xf32> -> vector<32x8xf32>
    %246 = vector.extract_strided_slice %223 {offsets = [0, 8], sizes = [32, 8], strides = [1, 1]} : vector<32x96xf32> to vector<32x8xf32>
    %247 = arith.truncf %246 : vector<32x8xf32> to vector<32x8xbf16>
    %248 = vector.extract_strided_slice %223 {offsets = [0, 40], sizes = [32, 8], strides = [1, 1]} : vector<32x96xf32> to vector<32x8xf32>
    %249 = arith.truncf %248 : vector<32x8xf32> to vector<32x8xbf16>
    %250 = vector.extract_strided_slice %223 {offsets = [0, 72], sizes = [32, 8], strides = [1, 1]} : vector<32x96xf32> to vector<32x8xf32>
    %251 = arith.truncf %250 : vector<32x8xf32> to vector<32x8xbf16>
    %cst_73 = arith.constant dense<0.000000e+00> : vector<32x32xf32>
    %252 = tpu.matmul %247, %249, %cst_73 {dimension_numbers = #tpu.dot_dimension_numbers<[1], [1], [0], [0], [0, 0, 1, 0], [], []>} : vector<32x8xbf16>, vector<32x8xbf16>, vector<32x32xf32> -> vector<32x32xf32>
    %cst_74 = arith.constant 0.353553385 : f32
    %253 = vector.broadcast %cst_74 : f32 to vector<32x32xf32>
    %254 = arith.mulf %252, %253 : vector<32x32xf32>
    %255 = arith.addf %254, %14 : vector<32x32xf32>
    %cst_75 = arith.constant dense<0xFF800000> : vector<32xf32>
    %256 = vector.multi_reduction <maximumf>, %255, %cst_75 [1] : vector<32x32xf32> to vector<32xf32>
    %257 = vector.shape_cast %256 : vector<32xf32> to vector<32x1xf32>
    %258 = vector.broadcast %257 : vector<32x1xf32> to vector<32x32xf32>
    %259 = arith.subf %255, %258 : vector<32x32xf32>
    %260 = math.exp %259 : vector<32x32xf32>
    %cst_76 = arith.constant dense<0.000000e+00> : vector<32xf32>
    %261 = vector.multi_reduction <add>, %260, %cst_76 [1] : vector<32x32xf32> to vector<32xf32>
    %262 = vector.shape_cast %261 : vector<32xf32> to vector<32x1xf32>
    %263 = tpu.reciprocal %262 {approx = true} : vector<32x1xf32> -> vector<32x1xf32>
    %264 = vector.broadcast %263 : vector<32x1xf32> to vector<32x32xf32>
    %265 = arith.mulf %260, %264 : vector<32x32xf32>
    %266 = arith.truncf %265 : vector<32x32xf32> to vector<32x32xbf16>
    %cst_77 = arith.constant dense<0.000000e+00> : vector<32x8xf32>
    %267 = tpu.matmul %266, %251, %cst_77 {dimension_numbers = #tpu.dot_dimension_numbers<[1], [0], [0], [1], [0, 0, 1, 1], [], []>} : vector<32x32xbf16>, vector<32x8xbf16>, vector<32x8xf32> -> vector<32x8xf32>
    %268 = vector.extract_strided_slice %223 {offsets = [0, 16], sizes = [32, 8], strides = [1, 1]} : vector<32x96xf32> to vector<32x8xf32>
    %269 = arith.truncf %268 : vector<32x8xf32> to vector<32x8xbf16>
    %270 = vector.extract_strided_slice %223 {offsets = [0, 48], sizes = [32, 8], strides = [1, 1]} : vector<32x96xf32> to vector<32x8xf32>
    %271 = arith.truncf %270 : vector<32x8xf32> to vector<32x8xbf16>
    %272 = vector.extract_strided_slice %223 {offsets = [0, 80], sizes = [32, 8], strides = [1, 1]} : vector<32x96xf32> to vector<32x8xf32>
    %273 = arith.truncf %272 : vector<32x8xf32> to vector<32x8xbf16>
    %cst_78 = arith.constant dense<0.000000e+00> : vector<32x32xf32>
    %274 = tpu.matmul %269, %271, %cst_78 {dimension_numbers = #tpu.dot_dimension_numbers<[1], [1], [0], [0], [0, 0, 1, 0], [], []>} : vector<32x8xbf16>, vector<32x8xbf16>, vector<32x32xf32> -> vector<32x32xf32>
    %cst_79 = arith.constant 0.353553385 : f32
    %275 = vector.broadcast %cst_79 : f32 to vector<32x32xf32>
    %276 = arith.mulf %274, %275 : vector<32x32xf32>
    %277 = arith.addf %276, %14 : vector<32x32xf32>
    %cst_80 = arith.constant dense<0xFF800000> : vector<32xf32>
    %278 = vector.multi_reduction <maximumf>, %277, %cst_80 [1] : vector<32x32xf32> to vector<32xf32>
    %279 = vector.shape_cast %278 : vector<32xf32> to vector<32x1xf32>
    %280 = vector.broadcast %279 : vector<32x1xf32> to vector<32x32xf32>
    %281 = arith.subf %277, %280 : vector<32x32xf32>
    %282 = math.exp %281 : vector<32x32xf32>
    %cst_81 = arith.constant dense<0.000000e+00> : vector<32xf32>
    %283 = vector.multi_reduction <add>, %282, %cst_81 [1] : vector<32x32xf32> to vector<32xf32>
    %284 = vector.shape_cast %283 : vector<32xf32> to vector<32x1xf32>
    %285 = tpu.reciprocal %284 {approx = true} : vector<32x1xf32> -> vector<32x1xf32>
    %286 = vector.broadcast %285 : vector<32x1xf32> to vector<32x32xf32>
    %287 = arith.mulf %282, %286 : vector<32x32xf32>
    %288 = arith.truncf %287 : vector<32x32xf32> to vector<32x32xbf16>
    %cst_82 = arith.constant dense<0.000000e+00> : vector<32x8xf32>
    %289 = tpu.matmul %288, %273, %cst_82 {dimension_numbers = #tpu.dot_dimension_numbers<[1], [0], [0], [1], [0, 0, 1, 1], [], []>} : vector<32x32xbf16>, vector<32x8xbf16>, vector<32x8xf32> -> vector<32x8xf32>
    %290 = vector.extract_strided_slice %223 {offsets = [0, 24], sizes = [32, 8], strides = [1, 1]} : vector<32x96xf32> to vector<32x8xf32>
    %291 = arith.truncf %290 : vector<32x8xf32> to vector<32x8xbf16>
    %292 = vector.extract_strided_slice %223 {offsets = [0, 56], sizes = [32, 8], strides = [1, 1]} : vector<32x96xf32> to vector<32x8xf32>
    %293 = arith.truncf %292 : vector<32x8xf32> to vector<32x8xbf16>
    %294 = vector.extract_strided_slice %223 {offsets = [0, 88], sizes = [32, 8], strides = [1, 1]} : vector<32x96xf32> to vector<32x8xf32>
    %295 = arith.truncf %294 : vector<32x8xf32> to vector<32x8xbf16>
    %cst_83 = arith.constant dense<0.000000e+00> : vector<32x32xf32>
    %296 = tpu.matmul %291, %293, %cst_83 {dimension_numbers = #tpu.dot_dimension_numbers<[1], [1], [0], [0], [0, 0, 1, 0], [], []>} : vector<32x8xbf16>, vector<32x8xbf16>, vector<32x32xf32> -> vector<32x32xf32>
    %cst_84 = arith.constant 0.353553385 : f32
    %297 = vector.broadcast %cst_84 : f32 to vector<32x32xf32>
    %298 = arith.mulf %296, %297 : vector<32x32xf32>
    %299 = arith.addf %298, %14 : vector<32x32xf32>
    %cst_85 = arith.constant dense<0xFF800000> : vector<32xf32>
    %300 = vector.multi_reduction <maximumf>, %299, %cst_85 [1] : vector<32x32xf32> to vector<32xf32>
    %301 = vector.shape_cast %300 : vector<32xf32> to vector<32x1xf32>
    %302 = vector.broadcast %301 : vector<32x1xf32> to vector<32x32xf32>
    %303 = arith.subf %299, %302 : vector<32x32xf32>
    %304 = math.exp %303 : vector<32x32xf32>
    %cst_86 = arith.constant dense<0.000000e+00> : vector<32xf32>
    %305 = vector.multi_reduction <add>, %304, %cst_86 [1] : vector<32x32xf32> to vector<32xf32>
    %306 = vector.shape_cast %305 : vector<32xf32> to vector<32x1xf32>
    %307 = tpu.reciprocal %306 {approx = true} : vector<32x1xf32> -> vector<32x1xf32>
    %308 = vector.broadcast %307 : vector<32x1xf32> to vector<32x32xf32>
    %309 = arith.mulf %304, %308 : vector<32x32xf32>
    %310 = arith.truncf %309 : vector<32x32xf32> to vector<32x32xbf16>
    %cst_87 = arith.constant dense<0.000000e+00> : vector<32x8xf32>
    %311 = tpu.matmul %310, %295, %cst_87 {dimension_numbers = #tpu.dot_dimension_numbers<[1], [0], [0], [1], [0, 0, 1, 1], [], []>} : vector<32x32xbf16>, vector<32x8xbf16>, vector<32x8xf32> -> vector<32x8xf32>
    %312 = tpu.concatenate %245, %267, %289, %311 in 1 : vector<32x8xf32>, vector<32x8xf32>, vector<32x8xf32>, vector<32x8xf32> -> vector<32x32xf32>
    %313 = arith.truncf %312 : vector<32x32xf32> to vector<32x32xbf16>
    %c448 = arith.constant 448 : index
    %c0_88 = arith.constant 0 : index
    %314 = vector.load %arg1[%c448, %c0_88] : memref<640x128xbf16, #tpu.memory_space<vmem>>, vector<32x32xbf16>
    %cst_89 = arith.constant dense<0.000000e+00> : vector<32x32xf32>
    %315 = tpu.matmul %313, %314, %cst_89 {dimension_numbers = #tpu.dot_dimension_numbers<[1], [0], [0], [1], [0, 0, 1, 1], [], []>} : vector<32x32xbf16>, vector<32x32xbf16>, vector<32x32xf32> -> vector<32x32xf32>
    %316 = arith.addf %195, %315 : vector<32x32xf32>
    %c21 = arith.constant 21 : index
    %c0_90 = arith.constant 0 : index
    %317 = vector.load %arg2[%c21, %c0_90] : memref<26x128xf32, #tpu.memory_space<vmem>>, vector<1x32xf32>
    %318 = vector.broadcast %317 : vector<1x32xf32> to vector<32x32xf32>
    %319 = arith.addf %316, %318 : vector<32x32xf32>
    %c22 = arith.constant 22 : index
    %c0_91 = arith.constant 0 : index
    %320 = vector.load %arg2[%c22, %c0_91] : memref<26x128xf32, #tpu.memory_space<vmem>>, vector<1x32xf32>
    %c23 = arith.constant 23 : index
    %c0_92 = arith.constant 0 : index
    %321 = vector.load %arg2[%c23, %c0_92] : memref<26x128xf32, #tpu.memory_space<vmem>>, vector<1x32xf32>
    %cst_93 = arith.constant dense<0.000000e+00> : vector<32xf32>
    %322 = vector.multi_reduction <add>, %319, %cst_93 [1] : vector<32x32xf32> to vector<32xf32>
    %323 = vector.shape_cast %322 : vector<32xf32> to vector<32x1xf32>
    %cst_94 = arith.constant 3.200000e+01 : f32
    %324 = vector.broadcast %cst_94 : f32 to vector<32x1xf32>
    %325 = arith.divf %323, %324 : vector<32x1xf32>
    %326 = vector.broadcast %325 : vector<32x1xf32> to vector<32x32xf32>
    %327 = arith.subf %319, %326 : vector<32x32xf32>
    %328 = arith.mulf %327, %327 : vector<32x32xf32>
    %cst_95 = arith.constant dense<0.000000e+00> : vector<32xf32>
    %329 = vector.multi_reduction <add>, %328, %cst_95 [1] : vector<32x32xf32> to vector<32xf32>
    %330 = vector.shape_cast %329 : vector<32xf32> to vector<32x1xf32>
    %cst_96 = arith.constant 3.200000e+01 : f32
    %331 = vector.broadcast %cst_96 : f32 to vector<32x1xf32>
    %332 = arith.divf %330, %331 : vector<32x1xf32>
    %cst_97 = arith.constant 9.99999997E-7 : f32
    %333 = vector.broadcast %cst_97 : f32 to vector<32x1xf32>
    %334 = arith.addf %332, %333 : vector<32x1xf32>
    %335 = math.rsqrt %334 : vector<32x1xf32>
    %336 = vector.broadcast %335 : vector<32x1xf32> to vector<32x32xf32>
    %337 = arith.mulf %327, %336 : vector<32x32xf32>
    %338 = vector.broadcast %320 : vector<1x32xf32> to vector<32x32xf32>
    %339 = arith.mulf %337, %338 : vector<32x32xf32>
    %340 = vector.broadcast %321 : vector<1x32xf32> to vector<32x32xf32>
    %341 = arith.addf %339, %340 : vector<32x32xf32>
    %342 = arith.truncf %341 : vector<32x32xf32> to vector<32x32xbf16>
    %c480 = arith.constant 480 : index
    %c0_98 = arith.constant 0 : index
    %343 = vector.load %arg1[%c480, %c0_98] : memref<640x128xbf16, #tpu.memory_space<vmem>>, vector<32x128xbf16>
    %cst_99 = arith.constant dense<0.000000e+00> : vector<32x128xf32>
    %344 = tpu.matmul %342, %343, %cst_99 {dimension_numbers = #tpu.dot_dimension_numbers<[1], [0], [0], [1], [0, 0, 1, 1], [], []>} : vector<32x32xbf16>, vector<32x128xbf16>, vector<32x128xf32> -> vector<32x128xf32>
    %c24 = arith.constant 24 : index
    %c0_100 = arith.constant 0 : index
    %345 = vector.load %arg2[%c24, %c0_100] : memref<26x128xf32, #tpu.memory_space<vmem>>, vector<1x128xf32>
    %346 = vector.broadcast %345 : vector<1x128xf32> to vector<32x128xf32>
    %347 = arith.addf %344, %346 : vector<32x128xf32>
    %cst_101 = arith.constant 5.000000e-01 : f32
    %348 = vector.broadcast %cst_101 : f32 to vector<32x128xf32>
    %349 = arith.mulf %348, %347 : vector<32x128xf32>
    %cst_102 = arith.constant 4.471500e-02 : f32
    %350 = vector.broadcast %cst_102 : f32 to vector<32x128xf32>
    %351 = arith.mulf %350, %347 : vector<32x128xf32>
    %352 = arith.mulf %351, %347 : vector<32x128xf32>
    %353 = arith.mulf %352, %347 : vector<32x128xf32>
    %354 = arith.addf %347, %353 : vector<32x128xf32>
    %cst_103 = arith.constant 0.797884583 : f32
    %355 = vector.broadcast %cst_103 : f32 to vector<32x128xf32>
    %356 = arith.mulf %355, %354 : vector<32x128xf32>
    %357 = math.tanh %356 : vector<32x128xf32>
    %cst_104 = arith.constant 1.000000e+00 : f32
    %358 = vector.broadcast %cst_104 : f32 to vector<32x128xf32>
    %359 = arith.addf %358, %357 : vector<32x128xf32>
    %360 = arith.mulf %349, %359 : vector<32x128xf32>
    %361 = arith.truncf %360 : vector<32x128xf32> to vector<32x128xbf16>
    %c512 = arith.constant 512 : index
    %c0_105 = arith.constant 0 : index
    %362 = vector.load %arg1[%c512, %c0_105] : memref<640x128xbf16, #tpu.memory_space<vmem>>, vector<128x32xbf16>
    %cst_106 = arith.constant dense<0.000000e+00> : vector<32x32xf32>
    %363 = tpu.matmul %361, %362, %cst_106 {dimension_numbers = #tpu.dot_dimension_numbers<[1], [0], [0], [1], [0, 0, 1, 1], [], []>} : vector<32x128xbf16>, vector<128x32xbf16>, vector<32x32xf32> -> vector<32x32xf32>
    %364 = arith.addf %319, %363 : vector<32x32xf32>
    %c25 = arith.constant 25 : index
    %c0_107 = arith.constant 0 : index
    %365 = vector.load %arg2[%c25, %c0_107] : memref<26x128xf32, #tpu.memory_space<vmem>>, vector<1x32xf32>
    %366 = vector.broadcast %365 : vector<1x32xf32> to vector<32x32xf32>
    %367 = arith.addf %364, %366 : vector<32x32xf32>
    %368 = vector.shape_cast %367 : vector<32x32xf32> to vector<4x8x32xf32>
    %369 = vector.extract_strided_slice %368 {offsets = [0, 0, 0], sizes = [4, 1, 32], strides = [1, 1, 1]} : vector<4x8x32xf32> to vector<4x1x32xf32>
    %370 = vector.shape_cast %369 : vector<4x1x32xf32> to vector<4x32xf32>
    %c8 = arith.constant 8 : index
    %c0_108 = arith.constant 0 : index
    %371 = vector.load %arg2[%c8, %c0_108] : memref<26x128xf32, #tpu.memory_space<vmem>>, vector<1x32xf32>
    %c9 = arith.constant 9 : index
    %c0_109 = arith.constant 0 : index
    %372 = vector.load %arg2[%c9, %c0_109] : memref<26x128xf32, #tpu.memory_space<vmem>>, vector<1x32xf32>
    %cst_110 = arith.constant dense<0.000000e+00> : vector<4xf32>
    %373 = vector.multi_reduction <add>, %370, %cst_110 [1] : vector<4x32xf32> to vector<4xf32>
    %374 = vector.shape_cast %373 : vector<4xf32> to vector<4x1xf32>
    %cst_111 = arith.constant 3.200000e+01 : f32
    %375 = vector.broadcast %cst_111 : f32 to vector<4x1xf32>
    %376 = arith.divf %374, %375 : vector<4x1xf32>
    %377 = vector.broadcast %376 : vector<4x1xf32> to vector<4x32xf32>
    %378 = arith.subf %370, %377 : vector<4x32xf32>
    %379 = arith.mulf %378, %378 : vector<4x32xf32>
    %cst_112 = arith.constant dense<0.000000e+00> : vector<4xf32>
    %380 = vector.multi_reduction <add>, %379, %cst_112 [1] : vector<4x32xf32> to vector<4xf32>
    %381 = vector.shape_cast %380 : vector<4xf32> to vector<4x1xf32>
    %cst_113 = arith.constant 3.200000e+01 : f32
    %382 = vector.broadcast %cst_113 : f32 to vector<4x1xf32>
    %383 = arith.divf %381, %382 : vector<4x1xf32>
    %cst_114 = arith.constant 9.99999997E-7 : f32
    %384 = vector.broadcast %cst_114 : f32 to vector<4x1xf32>
    %385 = arith.addf %383, %384 : vector<4x1xf32>
    %386 = math.rsqrt %385 : vector<4x1xf32>
    %387 = vector.broadcast %386 : vector<4x1xf32> to vector<4x32xf32>
    %388 = arith.mulf %378, %387 : vector<4x32xf32>
    %389 = vector.broadcast %371 : vector<1x32xf32> to vector<4x32xf32>
    %390 = arith.mulf %388, %389 : vector<4x32xf32>
    %391 = vector.broadcast %372 : vector<1x32xf32> to vector<4x32xf32>
    %392 = arith.addf %390, %391 : vector<4x32xf32>
    %c0_115 = arith.constant 0 : index
    %c0_116 = arith.constant 0 : index
    %393 = vector.load %arg3[%c0_115, %c0_116] : memref<4x32xf32, #tpu.memory_space<vmem>>, vector<4x32xf32>
    tpu.vector_store %arg3[%c0_115, %c0_116], %392 {strides = array<i32>} : memref<4x32xf32, #tpu.memory_space<vmem>>, vector<4x32xf32>,
    return
  }
}

</mosaic_0001>

<llo_original>
// kernel: vit_feat.1
$region0: #{vit_feat.1}
  #allocation0 [shape = 'u32[]', space=smem, size = 0x4, offset = 0x4, fixed_abs, tag = 'smem constant byte address 0x4 - core index']
  #allocation1 [shape = 'u32[72,128]{1,0:T(1,128)}', space=vmem, size = 0x9000, scoped, tag = 'internal scratch']
  %s0 = inlined_call_operand.vmem [shape: bf16[32,192], index: 0, kind: input, shape index: {}]
  %s1 = inlined_call_operand.vmem [shape: bf16[640,128], index: 1, kind: input, shape index: {}]
  %s2 = inlined_call_operand.vmem [shape: f32[26,128], index: 2, kind: input, shape index: {}]
  %s3 = inlined_call_operand.vmem [shape: f32[4,32], index: 3, kind: output, shape index: {}]
  %s4 = sld [smem:[#allocation0]]
  $region22: #{vit_feat.1} parent=0
    _
  %s6 = ssub.s32 1, %s4
  %s7 = scalar_select 0, %s6, %s4
  // Predicated region
  $region2: #{vit_feat.1} parent=0 // pred_check
    _
  $region3: #{vit_feat.1} parent=0 // pred_check_branch
    %9 = sbr.rel (0) target = $region5
  $region4: #{vit_feat.1} parent=0 // pred_region
    _
  $region5: #{vit_feat.1} parent=0 // pred_fallthru
    _
  // Predicated region
  $region6: #{vit_feat.1} parent=0 // pred_check
    _
  $region7: #{vit_feat.1} parent=0 // pred_check_branch
    %11 = sbr.rel (0) target = $region9
  $region8: #{vit_feat.1} parent=0 // pred_region
    _
  $region9: #{vit_feat.1} parent=0 // pred_fallthru
    _
  // Predicated region
  $region10: #{vit_feat.1} parent=0 // pred_check
    _
  $region11: #{vit_feat.1} parent=0 // pred_check_branch
    %13 = sbr.rel (0) target = $region13
  $region12: #{vit_feat.1} parent=0 // pred_region
    _
  $region13: #{vit_feat.1} parent=0 // pred_fallthru
    _
  %v15 = vlaneseq
  %v16 = vshrl.u32 %v15, 7
  %v17 = vadd.s32 %v16, 8
  %v18 = vadd.s32 %v16, 16
  %v19 = vadd.s32 %v16, 24
  %v20 = vlaneseq
  %v21 = vand.u32 %v20, 127
  %v22 = vshra.s32 %v16, 3
  %v23 = vshra.s32 %v17, 3
  %v24 = vshra.s32 %v18, 3
  %v25 = vshra.s32 %v19, 3
  %v26 = vshra.s32 %v21, 3
  %vm27 = vcmp.eq.s32.totalorder %v22, %v26
  %vm28 = vcmp.eq.s32.totalorder %v23, %v26
  %vm29 = vcmp.eq.s32.totalorder %v24, %v26
  %vm30 = vcmp.eq.s32.totalorder %v25, %v26
  %v31 = vand.u32 %v21, 7
  %vm32 = vcmp.lt.s32.totalorder %v31, 5
  %vm33 = vmand %vm27, %vm32
  %vm34 = vmand %vm28, %vm32
  %vm35 = vmand %vm29, %vm32
  %vm36 = vmand %vm30, %vm32
  %v37 = vsel %vm33, 0.0, -1e+30
  %v38 = vsel %vm34, 0.0, -1e+30
  %v39 = vsel %vm35, 0.0, -1e+30
  %v40 = vsel %vm36, 0.0, -1e+30
  %v41 = vld [vmem:[%s0] sm:$0xff]
  %v42 = vld [vmem:[%s0 + $0x8] sm:$0xff]
  %v43 = vld [vmem:[%s0 + $0x10] sm:$0xff]
  %v44 = vld [vmem:[%s0 + $0x18] sm:$0xff]
  %v45 = vld [vmem:[%s1] sm:$0xf]
  %v46 = vld [vmem:[%s1 + $0x4] sm:$0xf]
  %v47 = vld [vmem:[%s1 + $0x8] sm:$0xf]
  %v48 = vld [vmem:[%s1 + $0xc] sm:$0xf]
  %v49 = vld [vmem:[%s1 + $0x10] sm:$0xf]
  %v50 = vld [vmem:[%s1 + $0x14] sm:$0xf]
  %v51 = vld [vmem:[%s1 + $0x18] sm:$0xf]
  %v52 = vld [vmem:[%s1 + $0x1c] sm:$0xf]
  %v53 = vld [vmem:[%s1 + $0x20] sm:$0xf]
  %v54 = vld [vmem:[%s1 + $0x24] sm:$0xf]
  %v55 = vld [vmem:[%s1 + $0x28] sm:$0xf]
  %v56 = vld [vmem:[%s1 + $0x2c] sm:$0xf]
  %v57 = vld [vmem:[%s1 + $0x30] sm:$0xf]
  %v58 = vld [vmem:[%s1 + $0x34] sm:$0xf]
  %v59 = vld [vmem:[%s1 + $0x38] sm:$0xf]
  %v60 = vld [vmem:[%s1 + $0x3c] sm:$0xf]
  %v61 = vld [vmem:[%s1 + $0x40] sm:$0xf]
  %v62 = vld [vmem:[%s1 + $0x44] sm:$0xf]
  %v63 = vld [vmem:[%s1 + $0x48] sm:$0xf]
  %v64 = vld [vmem:[%s1 + $0x4c] sm:$0xf]
  %v65 = vld [vmem:[%s1 + $0x50] sm:$0xf]
  %v66 = vld [vmem:[%s1 + $0x54] sm:$0xf]
  %v67 = vld [vmem:[%s1 + $0x58] sm:$0xf]
  %v68 = vld [vmem:[%s1 + $0x5c] sm:$0xf]
  %v73 = vunpack.c.l.b16 %v41
  %v74 = vunpack.c.h.b16 %v41
  %v75 = vunpack.c.l.b16 %v42
  %v76 = vunpack.c.h.b16 %v42
  %v77 = vunpack.c.l.b16 %v43
  %v78 = vunpack.c.h.b16 %v43
  %v79 = vunpack.c.l.b16 %v44
  %v80 = vunpack.c.h.b16 %v44
  %v81 = vpack.c.b16 %v75, %v73
  %v82 = vpack.c.b16 %v76, %v74
  %v83 = vpack.c.b16 %v79, %v77
  %v84 = vpack.c.b16 %v80, %v78
  %v111 = vunpack.c.l.b16 %v45
  %v112 = vunpack.c.l.b16 %v46
  %v113 = vunpack.c.l.b16 %v47
  %v114 = vunpack.c.l.b16 %v48
  %v115 = vunpack.c.l.b16 %v49
  %v116 = vunpack.c.l.b16 %v50
  %v117 = vunpack.c.l.b16 %v51
  %v118 = vunpack.c.l.b16 %v52
  %v119 = vunpack.c.l.b16 %v53
  %v120 = vunpack.c.l.b16 %v54
  %v121 = vunpack.c.l.b16 %v55
  %v122 = vunpack.c.l.b16 %v56
  %v123 = vunpack.c.l.b16 %v57
  %v124 = vunpack.c.l.b16 %v58
  %v125 = vunpack.c.l.b16 %v59
  %v126 = vunpack.c.l.b16 %v60
  %v127 = vunpack.c.l.b16 %v61
  %v128 = vunpack.c.l.b16 %v62
  %v129 = vunpack.c.l.b16 %v63
  %v130 = vunpack.c.l.b16 %v64
  %v131 = vunpack.c.l.b16 %v65
  %v132 = vunpack.c.l.b16 %v66
  %v133 = vunpack.c.l.b16 %v67
  %v134 = vunpack.c.l.b16 %v68
  %v135 = vpack.c.b16 %v112, %v111
  %v136 = vpack.c.b16 %v114, %v113
  %v137 = vpack.c.b16 %v116, %v115
  %v138 = vpack.c.b16 %v118, %v117
  %v139 = vpack.c.b16 %v120, %v119
  %v140 = vpack.c.b16 %v122, %v121
  %v141 = vpack.c.b16 %v124, %v123
  %v142 = vpack.c.b16 %v126, %v125
  %v143 = vpack.c.b16 %v128, %v127
  %v144 = vpack.c.b16 %v130, %v129
  %v145 = vpack.c.b16 %v132, %v131
  %v146 = vpack.c.b16 %v134, %v133
  %vm159 = vcmask 523264
  %v161 = vsel %vm159, %v82, 0
  %v164 = vsel %vm159, %v84, 0
  %166 = vmatpush.bf16.msra.mxu0 %v142
  %167 = vmatpush.bf16.msra.mxu0 %v141
  %168 = vmatpush.bf16.msra.mxu0 %v140
  %169 = vmatpush.bf16.msra.mxu0 %v139
  %170 = vmatpush.bf16.msra.mxu0 %v138
  %171 = vmatpush.bf16.msra.mxu0 %v137
  %172 = vmatpush.bf16.msra.mxu0 %v136
  %173 = vmatpush.bf16.msra.mxu0 %v135
  %174 = vmatmul.bf16.gmra.mxu0 %v81
  %v175 = vpop.f32.mrf.mxu0
  %v176 = vadd.f32 0.0, %v175
  %v177 = vpop.f32.mrf.mxu0
  %v178 = vadd.f32 0.0, %v177
  %179 = vmatmul.bf16.gmra.mxu0 %v83
  %v180 = vpop.f32.mrf.mxu0
  %v181 = vadd.f32 0.0, %v180
  %v182 = vpop.f32.mrf.mxu0
  %v183 = vadd.f32 0.0, %v182
  %184 = vdwg.mxu0
  %185 = vmatpush.bf16.msra.mxu0 0
  %186 = vmatpush.bf16.msra.mxu0 0
  %187 = vmatpush.bf16.msra.mxu0 0
  %188 = vmatpush.bf16.msra.mxu0 0
  %189 = vmatpush.bf16.msra.mxu0 %v146
  %190 = vmatpush.bf16.msra.mxu0 %v145
  %191 = vmatpush.bf16.msra.mxu0 %v144
  %192 = vmatpush.bf16.msra.mxu0 %v143
  %193 = vmatmul.bf16.gmra.mxu0 %v161
  %v194 = vpop.f32.mrf.mxu0
  %v195 = vadd.f32 %v176, %v194
  %v196 = vpop.f32.mrf.mxu0
  %v197 = vadd.f32 %v178, %v196
  %198 = vmatmul.bf16.gmra.mxu0 %v164
  %v199 = vpop.f32.mrf.mxu0
  %v200 = vadd.f32 %v181, %v199
  %v201 = vpop.f32.mrf.mxu0
  %v202 = vadd.f32 %v183, %v201
  %203 = vdwg.mxu0
  %v204 = vld [vmem:[%s2] sm:$0xff]
  %v205 = vadd.f32 %v195, %v204
  %v206 = vadd.f32 %v197, %v204
  %v207 = vadd.f32 %v200, %v204
  %v208 = vadd.f32 %v202, %v204
  %v209 = vld [vmem:[%s2 + $0xa] sm:$0x1]
  %v210 = vld [vmem:[%s2 + $0xb] sm:$0x1]
  %vm211 = vcmask 261120
  %v212 = vsel %vm211, %v205, 0.0
  %213 = vadd.xlane.f32.xlu0 %v212
  %v214 = vpop.xlane.xlu0 %213
  %v215 = vsel %vm211, %v206, 0.0
  %216 = vadd.xlane.f32.xlu0 %v215
  %v217 = vpop.xlane.xlu0 %216
  %v218 = vsel %vm211, %v207, 0.0
  %219 = vadd.xlane.f32.xlu0 %v218
  %v220 = vpop.xlane.xlu0 %219
  %v221 = vsel %vm211, %v208, 0.0
  %222 = vadd.xlane.f32.xlu0 %v221
  %v223 = vpop.xlane.xlu0 %222
  %v224 = vrcp.pop 32.0
  %v225 = vmul.f32 32.0, %v224
  %v226 = vsub.f32 1.0, %v225
  %v227 = vmul.f32 %v224, %v226
  %v228 = vadd.f32 %v224, %v227
  %vm229 = vweird.f32 %v224
  %v230 = vsel %vm229, %v224, %v228
  %v231 = vmul.f32 %v214, %v230
  %v232 = vmul.f32 %v217, %v230
  %v233 = vmul.f32 %v220, %v230
  %v234 = vmul.f32 %v223, %v230
  %v235 = vsub.f32 %v205, %v231
  %v236 = vsub.f32 %v206, %v232
  %v237 = vsub.f32 %v207, %v233
  %v238 = vsub.f32 %v208, %v234
  %v239 = vmul.f32 %v235, %v235
  %v240 = vmul.f32 %v236, %v236
  %v241 = vmul.f32 %v237, %v237
  %v242 = vmul.f32 %v238, %v238
  %v243 = vsel %vm211, %v239, 0.0
  %244 = vadd.xlane.f32.xlu0 %v243
  %v245 = vpop.xlane.xlu0 %244
  %v246 = vsel %vm211, %v240, 0.0
  %247 = vadd.xlane.f32.xlu0 %v246
  %v248 = vpop.xlane.xlu0 %247
  %v249 = vsel %vm211, %v241, 0.0
  %250 = vadd.xlane.f32.xlu0 %v249
  %v251 = vpop.xlane.xlu0 %250
  %v252 = vsel %vm211, %v242, 0.0
  %253 = vadd.xlane.f32.xlu0 %v252
  %v254 = vpop.xlane.xlu0 %253
  %v255 = vmul.f32 %v245, %v230
  %v256 = vmul.f32 %v248, %v230
  %v257 = vmul.f32 %v251, %v230
  %v258 = vmul.f32 %v254, %v230
  %v259 = vadd.f32 %v255, 1e-06
  %v260 = vadd.f32 %v256, 1e-06
  %v261 = vadd.f32 %v257, 1e-06
  %v262 = vadd.f32 %v258, 1e-06
  %v263 = vrsqrt.pop %v259
  %v264 = vmul.f32 %v263, %v259
  %v265 = vmul.f32 %v264, %v263
  %v266 = vmul.f32 0.5, %v265
  %v267 = vsub.f32 1.5, %v266
  %v268 = vmul.f32 %v263, %v267
  %vm269 = vweird.f32 %v259
  %vm270 = vweird.f32 %v263
  %vm271 = vmor %vm269, %vm270
  %v272 = vsel %vm271, %v263, %v268
  %v273 = vrsqrt.pop %v260
  %v274 = vmul.f32 %v273, %v260
  %v275 = vmul.f32 %v274, %v273
  %v276 = vmul.f32 0.5, %v275
  %v277 = vsub.f32 1.5, %v276
  %v278 = vmul.f32 %v273, %v277
  %vm279 = vweird.f32 %v260
  %vm280 = vweird.f32 %v273
  %vm281 = vmor %vm279, %vm280
  %v282 = vsel %vm281, %v273, %v278
  %v283 = vrsqrt.pop %v261
  %v284 = vmul.f32 %v283, %v261
  %v285 = vmul.f32 %v284, %v283
  %v286 = vmul.f32 0.5, %v285
  %v287 = vsub.f32 1.5, %v286
  %v288 = vmul.f32 %v283, %v287
  %vm289 = vweird.f32 %v261
  %vm290 = vweird.f32 %v283
  %vm291 = vmor %vm289, %vm290
  %v292 = vsel %vm291, %v283, %v288
  %v293 = vrsqrt.pop %v262
  %v294 = vmul.f32 %v293, %v262
  %v295 = vmul.f32 %v294, %v293
  %v296 = vmul.f32 0.5, %v295
  %v297 = vsub.f32 1.5, %v296
  %v298 = vmul.f32 %v293, %v297
  %vm299 = vweird.f32 %v262
  %vm300 = vweird.f32 %v293
  %vm301 = vmor %vm299, %vm300
  %v302 = vsel %vm301, %v293, %v298
  %v303 = vmul.f32 %v235, %v272
  %v304 = vmul.f32 %v236, %v282
  %v305 = vmul.f32 %v237, %v292
  %v306 = vmul.f32 %v238, %v302
  %v307 = vperm.slane %v209, 0
  %v308 = vmul.f32 %v303, %v307
  %v309 = vmul.f32 %v304, %v307
  %v310 = vmul.f32 %v305, %v307
  %v311 = vmul.f32 %v306, %v307
  %v312 = vperm.slane %v210, 0
  %v313 = vadd.f32 %v308, %v312
  %v314 = vadd.f32 %v309, %v312
  %v315 = vadd.f32 %v310, %v312
  %v316 = vadd.f32 %v311, %v312
  %v317 = vpack.c.bf16 %v314, %v313
  %v318 = vpack.c.bf16 %v316, %v315
  %v319 = vld [vmem:[%s1 + $0x60] sm:$0xf]
  %v320 = vld [vmem:[%s1 + $0x64] sm:$0xf]
  %v321 = vld [vmem:[%s1 + $0x68] sm:$0xf]
  %v322 = vld [vmem:[%s1 + $0x6c] sm:$0xf]
  %v323 = vld [vmem:[%s2 + $0xc] sm:$0x1]
  %v324 = vperm.slane %v323, 0
  %v329 = vunpack.c.l.b16 %v319
  %v330 = vunpack.c.l.b16 %v320
  %v331 = vunpack.c.l.b16 %v321
  %v332 = vunpack.c.l.b16 %v322
  %v333 = vpack.c.b16 %v330, %v329
  %v334 = vpack.c.b16 %v332, %v331
  %v338 = vsel %vm211, %v317, 0
  %v341 = vsel %vm211, %v318, 0
  %343 = vmatpush.bf16.msra.mxu0 0
  %344 = vmatpush.bf16.msra.mxu0 0
  %345 = vmatpush.bf16.msra.mxu0 0
  %346 = vmatpush.bf16.msra.mxu0 0
  %347 = vmatpush.bf16.msra.mxu0 0
  %348 = vmatpush.bf16.msra.mxu0 0
  %349 = vmatpush.bf16.msra.mxu0 %v334
  %350 = vmatpush.bf16.msra.mxu0 %v333
  %351 = vmatmul.bf16.gmra.mxu0 %v338
  %v352 = vpop.f32.mrf.mxu0
  %v353 = vadd.f32 %v324, %v352
  %v354 = vpop.f32.mrf.mxu0
  %v355 = vadd.f32 %v324, %v354
  %356 = vmatmul.bf16.gmra.mxu0 %v341
  %v357 = vpop.f32.mrf.mxu0
  %v358 = vadd.f32 %v324, %v357
  %v359 = vpop.f32.mrf.mxu0
  %v360 = vadd.f32 %v324, %v359
  %361 = vdwg.mxu0
  %v362 = vpack.c.bf16 %v355, %v353
  %v363 = vpack.c.bf16 %v360, %v358
  %366 = vrot.lane.b32.xlu0 %v362, 96
  %v367 = vpop.permute.xlu0 %366
  %368 = vrot.lane.b32.xlu0 %v363, 96
  %v369 = vpop.permute.xlu0 %368
  %vm370 = vcmask 64512
  %v372 = vsel %vm370, %v362, 0
  %v375 = vsel %vm370, %v363, 0
  %v378 = vsel %vm370, %v367, 0
  %v381 = vsel %vm370, %v369, 0
  %383 = vmatpush.bf16.xpose.msra.mxu0 0
  %384 = vmatpush.bf16.xpose.msra.mxu0 0
  %385 = vmatpush.bf16.xpose.msra.mxu0 0
  %386 = vmatpush.bf16.xpose.msra.mxu0 0
  %387 = vmatpush.bf16.xpose.msra.mxu0 0
  %388 = vmatpush.bf16.xpose.msra.mxu0 0
  %389 = vmatpush.bf16.xpose.msra.mxu0 %v381
  %390 = vmatpush.bf16.xpose.msra.mxu0 %v378
  %391 = vmatmul.bf16.gmra.mxu0 %v372
  %v392 = vpop.f32.mrf.mxu0
  %v393 = vadd.f32 0.0, %v392
  %v394 = vpop.f32.mrf.mxu0
  %v395 = vadd.f32 0.0, %v394
  %396 = vmatmul.bf16.gmra.mxu0 %v375
  %v397 = vpop.f32.mrf.mxu0
  %v398 = vadd.f32 0.0, %v397
  %v399 = vpop.f32.mrf.mxu0
  %v400 = vadd.f32 0.0, %v399
  %401 = vdwg.mxu0
  %v402 = vmul.f32 %v393, 0.35355338
  %v403 = vmul.f32 %v395, 0.35355338
  %v404 = vmul.f32 %v398, 0.35355338
  %v405 = vmul.f32 %v400, 0.35355338
  %v406 = vadd.f32 %v402, %v37
  %v407 = vadd.f32 %v403, %v38
  %v408 = vadd.f32 %v404, %v39
  %v409 = vadd.f32 %v405, %v40
  %v410 = vsel %vm211, %v406, -inf
  %411 = vmax.xlane.f32.xlu0 %v410
  %v412 = vpop.xlane.xlu0 %411
  %v413 = vsel %vm211, %v407, -inf
  %414 = vmax.xlane.f32.xlu0 %v413
  %v415 = vpop.xlane.xlu0 %414
  %v416 = vsel %vm211, %v408, -inf
  %417 = vmax.xlane.f32.xlu0 %v416
  %v418 = vpop.xlane.xlu0 %417
  %v419 = vsel %vm211, %v409, -inf
  %420 = vmax.xlane.f32.xlu0 %v419
  %v421 = vpop.xlane.xlu0 %420
  %v422 = vsub.f32 %v406, %v412
  %v423 = vsub.f32 %v407, %v415
  %v424 = vsub.f32 %v408, %v418
  %v425 = vsub.f32 %v409, %v421
  %v426 = vmul.f32 %v422, 1.442695
  %v427 = vpow.pop %v426
  %v428 = vmul.f32 %v423, 1.442695
  %v429 = vpow.pop %v428
  %v430 = vmul.f32 %v424, 1.442695
  %v431 = vpow.pop %v430
  %v432 = vmul.f32 %v425, 1.442695
  %v433 = vpow.pop %v432
  %v434 = vsel %vm211, %v427, 0.0
  %435 = vadd.xlane.f32.xlu0 %v434
  %v436 = vpop.xlane.xlu0 %435
  %v437 = vsel %vm211, %v429, 0.0
  %438 = vadd.xlane.f32.xlu0 %v437
  %v439 = vpop.xlane.xlu0 %438
  %v440 = vsel %vm211, %v431, 0.0
  %441 = vadd.xlane.f32.xlu0 %v440
  %v442 = vpop.xlane.xlu0 %441
  %v443 = vsel %vm211, %v433, 0.0
  %444 = vadd.xlane.f32.xlu0 %v443
  %v445 = vpop.xlane.xlu0 %444
  %v446 = vrcp.pop %v436
  %v447 = vrcp.pop %v439
  %v448 = vrcp.pop %v442
  %v449 = vrcp.pop %v445
  %v450 = vmul.f32 %v427, %v446
  %v451 = vmul.f32 %v429, %v447
  %v452 = vmul.f32 %v431, %v448
  %v453 = vmul.f32 %v433, %v449
  %v454 = vpack.c.bf16 %v451, %v450
  %v455 = vpack.c.bf16 %v453, %v452
  %456 = vrot.lane.b32.xlu0 %v362, 64
  %v457 = vpop.permute.xlu0 %456
  %458 = vrot.lane.b32.xlu0 %v363, 64
  %v459 = vpop.permute.xlu0 %458
  %v463 = vsel %vm211, %v454, 0
  %v466 = vsel %vm211, %v455, 0
  %468 = vmatpush.bf16.msra.mxu0 0
  %469 = vmatpush.bf16.msra.mxu0 0
  %470 = vmatpush.bf16.msra.mxu0 0
  %471 = vmatpush.bf16.msra.mxu0 0
  %472 = vmatpush.bf16.msra.mxu0 0
  %473 = vmatpush.bf16.msra.mxu0 0
  %474 = vmatpush.bf16.msra.mxu0 %v459
  %475 = vmatpush.bf16.msra.mxu0 %v457
  %476 = vmatmul.bf16.gmra.mxu0 %v463
  %v477 = vpop.f32.mrf.mxu0
  %v478 = vadd.f32 0.0, %v477
  %v479 = vpop.f32.mrf.mxu0
  %v480 = vadd.f32 0.0, %v479
  %481 = vmatmul.bf16.gmra.mxu0 %v466
  %v482 = vpop.f32.mrf.mxu0
  %v483 = vadd.f32 0.0, %v482
  %v484 = vpop.f32.mrf.mxu0
  %v485 = vadd.f32 0.0, %v484
  %486 = vdwg.mxu0
  %487 = vrot.lane.b32.xlu0 %v362, 120
  %v488 = vpop.permute.xlu0 %487
  %489 = vrot.lane.b32.xlu0 %v363, 120
  %v490 = vpop.permute.xlu0 %489
  %491 = vrot.lane.b32.xlu0 %v362, 88
  %v492 = vpop.permute.xlu0 %491
  %493 = vrot.lane.b32.xlu0 %v363, 88
  %v494 = vpop.permute.xlu0 %493
  %v496 = vsel %vm370, %v488, 0
  %v499 = vsel %vm370, %v490, 0
  %v502 = vsel %vm370, %v492, 0
  %v505 = vsel %vm370, %v494, 0
  %507 = vmatpush.bf16.xpose.msra.mxu0 0
  %508 = vmatpush.bf16.xpose.msra.mxu0 0
  %509 = vmatpush.bf16.xpose.msra.mxu0 0
  %510 = vmatpush.bf16.xpose.msra.mxu0 0
  %511 = vmatpush.bf16.xpose.msra.mxu0 0
  %512 = vmatpush.bf16.xpose.msra.mxu0 0
  %513 = vmatpush.bf16.xpose.msra.mxu0 %v505
  %514 = vmatpush.bf16.xpose.msra.mxu0 %v502
  %515 = vmatmul.bf16.gmra.mxu0 %v496
  %v516 = vpop.f32.mrf.mxu0
  %v517 = vadd.f32 0.0, %v516
  %v518 = vpop.f32.mrf.mxu0
  %v519 = vadd.f32 0.0, %v518
  %520 = vmatmul.bf16.gmra.mxu0 %v499
  %v521 = vpop.f32.mrf.mxu0
  %v522 = vadd.f32 0.0, %v521
  %v523 = vpop.f32.mrf.mxu0
  %v524 = vadd.f32 0.0, %v523
  %525 = vdwg.mxu0
  %v526 = vmul.f32 %v517, 0.35355338
  %v527 = vmul.f32 %v519, 0.35355338
  %v528 = vmul.f32 %v522, 0.35355338
  %v529 = vmul.f32 %v524, 0.35355338
  %v530 = vadd.f32 %v526, %v37
  %v531 = vadd.f32 %v527, %v38
  %v532 = vadd.f32 %v528, %v39
  %v533 = vadd.f32 %v529, %v40
  %v534 = vsel %vm211, %v530, -inf
  %535 = vmax.xlane.f32.xlu0 %v534
  %v536 = vpop.xlane.xlu0 %535
  %v537 = vsel %vm211, %v531, -inf
  %538 = vmax.xlane.f32.xlu0 %v537
  %v539 = vpop.xlane.xlu0 %538
  %v540 = vsel %vm211, %v532, -inf
  %541 = vmax.xlane.f32.xlu0 %v540
  %v542 = vpop.xlane.xlu0 %541
  %v543 = vsel %vm211, %v533, -inf
  %544 = vmax.xlane.f32.xlu0 %v543
  %v545 = vpop.xlane.xlu0 %544
  %v546 = vsub.f32 %v530, %v536
  %v547 = vsub.f32 %v531, %v539
  %v548 = vsub.f32 %v532, %v542
  %v549 = vsub.f32 %v533, %v545
  %v550 = vmul.f32 %v546, 1.442695
  %v551 = vpow.pop %v550
  %v552 = vmul.f32 %v547, 1.442695
  %v553 = vpow.pop %v552
  %v554 = vmul.f32 %v548, 1.442695
  %v555 = vpow.pop %v554
  %v556 = vmul.f32 %v549, 1.442695
  %v557 = vpow.pop %v556
  %v558 = vsel %vm211, %v551, 0.0
  %559 = vadd.xlane.f32.xlu0 %v558
  %v560 = vpop.xlane.xlu0 %559
  %v561 = vsel %vm211, %v553, 0.0
  %562 = vadd.xlane.f32.xlu0 %v561
  %v563 = vpop.xlane.xlu0 %562
  %v564 = vsel %vm211, %v555, 0.0
  %565 = vadd.xlane.f32.xlu0 %v564
  %v566 = vpop.xlane.xlu0 %565
  %v567 = vsel %vm211, %v557, 0.0
  %568 = vadd.xlane.f32.xlu0 %v567
  %v569 = vpop.xlane.xlu0 %568
  %v570 = vrcp.pop %v560
  %v571 = vrcp.pop %v563
  %v572 = vrcp.pop %v566
  %v573 = vrcp.pop %v569
  %v574 = vmul.f32 %v551, %v570
  %v575 = vmul.f32 %v553, %v571
  %v576 = vmul.f32 %v555, %v572
  %v577 = vmul.f32 %v557, %v573
  %v578 = vpack.c.bf16 %v575, %v574
  %v579 = vpack.c.bf16 %v577, %v576
  %580 = vrot.lane.b32.xlu0 %v362, 56
  %v581 = vpop.permute.xlu0 %580
  %582 = vrot.lane.b32.xlu0 %v363, 56
  %v583 = vpop.permute.xlu0 %582
  %v587 = vsel %vm211, %v578, 0
  %v590 = vsel %vm211, %v579, 0
  %592 = vmatpush.bf16.msra.mxu0 0
  %593 = vmatpush.bf16.msra.mxu0 0
  %594 = vmatpush.bf16.msra.mxu0 0
  %595 = vmatpush.bf16.msra.mxu0 0
  %596 = vmatpush.bf16.msra.mxu0 0
  %597 = vmatpush.bf16.msra.mxu0 0
  %598 = vmatpush.bf16.msra.mxu0 %v583
  %599 = vmatpush.bf16.msra.mxu0 %v581
  %600 = vmatmul.bf16.gmra.mxu0 %v587
  %v601 = vpop.f32.mrf.mxu0
  %v602 = vadd.f32 0.0, %v601
  %v603 = vpop.f32.mrf.mxu0
  %v604 = vadd.f32 0.0, %v603
  %605 = vmatmul.bf16.gmra.mxu0 %v590
  %v606 = vpop.f32.mrf.mxu0
  %v607 = vadd.f32 0.0, %v606
  %v608 = vpop.f32.mrf.mxu0
  %v609 = vadd.f32 0.0, %v608
  %610 = vdwg.mxu0
  %611 = vrot.lane.b32.xlu0 %v362, 112
  %v612 = vpop.permute.xlu0 %611
  %613 = vrot.lane.b32.xlu0 %v363, 112
  %v614 = vpop.permute.xlu0 %613
  %615 = vrot.lane.b32.xlu0 %v362, 80
  %v616 = vpop.permute.xlu0 %615
  %617 = vrot.lane.b32.xlu0 %v363, 80
  %v618 = vpop.permute.xlu0 %617
  %v620 = vsel %vm370, %v612, 0
  %v623 = vsel %vm370, %v614, 0
  %v626 = vsel %vm370, %v616, 0
  %v629 = vsel %vm370, %v618, 0
  %631 = vmatpush.bf16.xpose.msra.mxu0 0
  %632 = vmatpush.bf16.xpose.msra.mxu0 0
  %633 = vmatpush.bf16.xpose.msra.mxu0 0
  %634 = vmatpush.bf16.xpose.msra.mxu0 0
  %635 = vmatpush.bf16.xpose.msra.mxu0 0
  %636 = vmatpush.bf16.xpose.msra.mxu0 0
  %637 = vmatpush.bf16.xpose.msra.mxu0 %v629
  %638 = vmatpush.bf16.xpose.msra.mxu0 %v626
  %639 = vmatmul.bf16.gmra.mxu0 %v620
  %v640 = vpop.f32.mrf.mxu0
  %v641 = vadd.f32 0.0, %v640
  %v642 = vpop.f32.mrf.mxu0
  %v643 = vadd.f32 0.0, %v642
  %644 = vmatmul.bf16.gmra.mxu0 %v623
  %v645 = vpop.f32.mrf.mxu0
  %v646 = vadd.f32 0.0, %v645
  %v647 = vpop.f32.mrf.mxu0
  %v648 = vadd.f32 0.0, %v647
  %649 = vdwg.mxu0
  %v650 = vmul.f32 %v641, 0.35355338
  %v651 = vmul.f32 %v643, 0.35355338
  %v652 = vmul.f32 %v646, 0.35355338
  %v653 = vmul.f32 %v648, 0.35355338
  %v654 = vadd.f32 %v650, %v37
  %v655 = vadd.f32 %v651, %v38
  %v656 = vadd.f32 %v652, %v39
  %v657 = vadd.f32 %v653, %v40
  %v658 = vsel %vm211, %v654, -inf
  %659 = vmax.xlane.f32.xlu0 %v658
  %v660 = vpop.xlane.xlu0 %659
  %v661 = vsel %vm211, %v655, -inf
  %662 = vmax.xlane.f32.xlu0 %v661
  %v663 = vpop.xlane.xlu0 %662
  %v664 = vsel %vm211, %v656, -inf
  %665 = vmax.xlane.f32.xlu0 %v664
  %v666 = vpop.xlane.xlu0 %665
  %v667 = vsel %vm211, %v657, -inf
  %668 = vmax.xlane.f32.xlu0 %v667
  %v669 = vpop.xlane.xlu0 %668
  %v670 = vsub.f32 %v654, %v660
  %v671 = vsub.f32 %v655, %v663
  %v672 = vsub.f32 %v656, %v666
  %v673 = vsub.f32 %v657, %v669
  %v674 = vmul.f32 %v670, 1.442695
  %v675 = vpow.pop %v674
  %v676 = vmul.f32 %v671, 1.442695
  %v677 = vpow.pop %v676
  %v678 = vmul.f32 %v672, 1.442695
  %v679 = vpow.pop %v678
  %v680 = vmul.f32 %v673, 1.442695
  %v681 = vpow.pop %v680
  %v682 = vsel %vm211, %v675, 0.0
  %683 = vadd.xlane.f32.xlu0 %v682
  %v684 = vpop.xlane.xlu0 %683
  %v685 = vsel %vm211, %v677, 0.0
  %686 = vadd.xlane.f32.xlu0 %v685
  %v687 = vpop.xlane.xlu0 %686
  %v688 = vsel %vm211, %v679, 0.0
  %689 = vadd.xlane.f32.xlu0 %v688
  %v690 = vpop.xlane.xlu0 %689
  %v691 = vsel %vm211, %v681, 0.0
  %692 = vadd.xlane.f32.xlu0 %v691
  %v693 = vpop.xlane.xlu0 %692
  %v694 = vrcp.pop %v684
  %v695 = vrcp.pop %v687
  %v696 = vrcp.pop %v690
  %v697 = vrcp.pop %v693
  %v698 = vmul.f32 %v675, %v694
  %v699 = vmul.f32 %v677, %v695
  %v700 = vmul.f32 %v679, %v696
  %v701 = vmul.f32 %v681, %v697
  %v702 = vpack.c.bf16 %v699, %v698
  %v703 = vpack.c.bf16 %v701, %v700
  %704 = vrot.lane.b32.xlu0 %v362, 48
  %v705 = vpop.permute.xlu0 %704
  %706 = vrot.lane.b32.xlu0 %v363, 48
  %v707 = vpop.permute.xlu0 %706
  %v711 = vsel %vm211, %v702, 0
  %v714 = vsel %vm211, %v703, 0
  %716 = vmatpush.bf16.msra.mxu0 0
  %717 = vmatpush.bf16.msra.mxu0 0
  %718 = vmatpush.bf16.msra.mxu0 0
  %719 = vmatpush.bf16.msra.mxu0 0
  %720 = vmatpush.bf16.msra.mxu0 0
  %721 = vmatpush.bf16.msra.mxu0 0
  %722 = vmatpush.bf16.msra.mxu0 %v707
  %723 = vmatpush.bf16.msra.mxu0 %v705
  %724 = vmatmul.bf16.gmra.mxu0 %v711
  %v725 = vpop.f32.mrf.mxu0
  %v726 = vadd.f32 0.0, %v725
  %v727 = vpop.f32.mrf.mxu0
  %v728 = vadd.f32 0.0, %v727
  %729 = vmatmul.bf16.gmra.mxu0 %v714
  %v730 = vpop.f32.mrf.mxu0
  %v731 = vadd.f32 0.0, %v730
  %v732 = vpop.f32.mrf.mxu0
  %v733 = vadd.f32 0.0, %v732
  %734 = vdwg.mxu0
  %735 = vrot.lane.b32.xlu0 %v362, 104
  %v736 = vpop.permute.xlu0 %735
  %737 = vrot.lane.b32.xlu0 %v363, 104
  %v738 = vpop.permute.xlu0 %737
  %739 = vrot.lane.b32.xlu0 %v362, 72
  %v740 = vpop.permute.xlu0 %739
  %741 = vrot.lane.b32.xlu0 %v363, 72
  %v742 = vpop.permute.xlu0 %741
  %v744 = vsel %vm370, %v736, 0
  %v747 = vsel %vm370, %v738, 0
  %v750 = vsel %vm370, %v740, 0
  %v753 = vsel %vm370, %v742, 0
  %755 = vmatpush.bf16.xpose.msra.mxu0 0
  %756 = vmatpush.bf16.xpose.msra.mxu0 0
  %757 = vmatpush.bf16.xpose.msra.mxu0 0
  %758 = vmatpush.bf16.xpose.msra.mxu0 0
  %759 = vmatpush.bf16.xpose.msra.mxu0 0
  %760 = vmatpush.bf16.xpose.msra.mxu0 0
  %761 = vmatpush.bf16.xpose.msra.mxu0 %v753
  %762 = vmatpush.bf16.xpose.msra.mxu0 %v750
  %763 = vmatmul.bf16.gmra.mxu0 %v744
  %v764 = vpop.f32.mrf.mxu0
  %v765 = vadd.f32 0.0, %v764
  %v766 = vpop.f32.mrf.mxu0
  %v767 = vadd.f32 0.0, %v766
  %768 = vmatmul.bf16.gmra.mxu0 %v747
  %v769 = vpop.f32.mrf.mxu0
  %v770 = vadd.f32 0.0, %v769
  %v771 = vpop.f32.mrf.mxu0
  %v772 = vadd.f32 0.0, %v771
  %773 = vdwg.mxu0
  %v774 = vmul.f32 %v765, 0.35355338
  %v775 = vmul.f32 %v767, 0.35355338
  %v776 = vmul.f32 %v770, 0.35355338
  %v777 = vmul.f32 %v772, 0.35355338
  %v778 = vadd.f32 %v774, %v37
  %v779 = vadd.f32 %v775, %v38
  %v780 = vadd.f32 %v776, %v39
  %v781 = vadd.f32 %v777, %v40
  %v782 = vsel %vm211, %v778, -inf
  %783 = vmax.xlane.f32.xlu0 %v782
  %v784 = vpop.xlane.xlu0 %783
  %v785 = vsel %vm211, %v779, -inf
  %786 = vmax.xlane.f32.xlu0 %v785
  %v787 = vpop.xlane.xlu0 %786
  %v788 = vsel %vm211, %v780, -inf
  %789 = vmax.xlane.f32.xlu0 %v788
  %v790 = vpop.xlane.xlu0 %789
  %v791 = vsel %vm211, %v781, -inf
  %792 = vmax.xlane.f32.xlu0 %v791
  %v793 = vpop.xlane.xlu0 %792
  %v794 = vsub.f32 %v778, %v784
  %v795 = vsub.f32 %v779, %v787
  %v796 = vsub.f32 %v780, %v790
  %v797 = vsub.f32 %v781, %v793
  %v798 = vmul.f32 %v794, 1.442695
  %v799 = vpow.pop %v798
  %v800 = vmul.f32 %v795, 1.442695
  %v801 = vpow.pop %v800
  %v802 = vmul.f32 %v796, 1.442695
  %v803 = vpow.pop %v802
  %v804 = vmul.f32 %v797, 1.442695
  %v805 = vpow.pop %v804
  %v806 = vsel %vm211, %v799, 0.0
  %807 = vadd.xlane.f32.xlu0 %v806
  %v808 = vpop.xlane.xlu0 %807
  %v809 = vsel %vm211, %v801, 0.0
  %810 = vadd.xlane.f32.xlu0 %v809
  %v811 = vpop.xlane.xlu0 %810
  %v812 = vsel %vm211, %v803, 0.0
  %813 = vadd.xlane.f32.xlu0 %v812
  %v814 = vpop.xlane.xlu0 %813
  %v815 = vsel %vm211, %v805, 0.0
  %816 = vadd.xlane.f32.xlu0 %v815
  %v817 = vpop.xlane.xlu0 %816
  %v818 = vrcp.pop %v808
  %v819 = vrcp.pop %v811
  %v820 = vrcp.pop %v814
  %v821 = vrcp.pop %v817
  %v822 = vmul.f32 %v799, %v818
  %v823 = vmul.f32 %v801, %v819
  %v824 = vmul.f32 %v803, %v820
  %v825 = vmul.f32 %v805, %v821
  %v826 = vpack.c.bf16 %v823, %v822
  %v827 = vpack.c.bf16 %v825, %v824
  %828 = vrot.lane.b32.xlu0 %v362, 40
  %v829 = vpop.permute.xlu0 %828
  %830 = vrot.lane.b32.xlu0 %v363, 40
  %v831 = vpop.permute.xlu0 %830
  %v835 = vsel %vm211, %v826, 0
  %v838 = vsel %vm211, %v827, 0
  %840 = vmatpush.bf16.msra.mxu0 0
  %841 = vmatpush.bf16.msra.mxu0 0
  %842 = vmatpush.bf16.msra.mxu0 0
  %843 = vmatpush.bf16.msra.mxu0 0
  %844 = vmatpush.bf16.msra.mxu0 0
  %845 = vmatpush.bf16.msra.mxu0 0
  %846 = vmatpush.bf16.msra.mxu0 %v831
  %847 = vmatpush.bf16.msra.mxu0 %v829
  %848 = vmatmul.bf16.gmra.mxu0 %v835
  %v849 = vpop.f32.mrf.mxu0
  %v850 = vadd.f32 0.0, %v849
  %v851 = vpop.f32.mrf.mxu0
  %v852 = vadd.f32 0.0, %v851
  %853 = vmatmul.bf16.gmra.mxu0 %v838
  %v854 = vpop.f32.mrf.mxu0
  %v855 = vadd.f32 0.0, %v854
  %v856 = vpop.f32.mrf.mxu0
  %v857 = vadd.f32 0.0, %v856
  %858 = vdwg.mxu0
  %863 = vrot.lane.b32.xlu0 %v602, 8
  %v864 = vpop.permute.xlu0 %863
  %865 = vrot.lane.b32.xlu0 %v604, 8
  %v866 = vpop.permute.xlu0 %865
  %867 = vrot.lane.b32.xlu0 %v607, 8
  %v868 = vpop.permute.xlu0 %867
  %869 = vrot.lane.b32.xlu0 %v609, 8
  %v870 = vpop.permute.xlu0 %869
  %879 = vrot.lane.b32.xlu0 %v726, 16
  %v880 = vpop.permute.xlu0 %879
  %881 = vrot.lane.b32.xlu0 %v728, 16
  %v882 = vpop.permute.xlu0 %881
  %883 = vrot.lane.b32.xlu0 %v731, 16
  %v884 = vpop.permute.xlu0 %883
  %885 = vrot.lane.b32.xlu0 %v733, 16
  %v886 = vpop.permute.xlu0 %885
  %895 = vrot.lane.b32.xlu0 %v850, 24
  %v896 = vpop.permute.xlu0 %895
  %897 = vrot.lane.b32.xlu0 %v852, 24
  %v898 = vpop.permute.xlu0 %897
  %899 = vrot.lane.b32.xlu0 %v855, 24
  %v900 = vpop.permute.xlu0 %899
  %901 = vrot.lane.b32.xlu0 %v857, 24
  %v902 = vpop.permute.xlu0 %901
  %v907 = vsel %vm370, %v478, %v864
  %v908 = vsel %vm370, %v480, %v866
  %v909 = vsel %vm370, %v483, %v868
  %v910 = vsel %vm370, %v485, %v870
  %vm911 = vcmask 130048
  %v912 = vsel %vm911, %v907, %v880
  %v913 = vsel %vm911, %v908, %v882
  %v914 = vsel %vm911, %v909, %v884
  %v915 = vsel %vm911, %v910, %v886
  %vm916 = vcmask 195584
  %v917 = vsel %vm916, %v912, %v896
  %v918 = vsel %vm916, %v913, %v898
  %v919 = vsel %vm916, %v914, %v900
  %v920 = vsel %vm916, %v915, %v902
  %v921 = vpack.c.bf16 %v918, %v917
  %v922 = vpack.c.bf16 %v920, %v919
  %v923 = vld [vmem:[%s1 + $0x70] sm:$0xf]
  %v924 = vld [vmem:[%s1 + $0x74] sm:$0xf]
  %v925 = vld [vmem:[%s1 + $0x78] sm:$0xf]
  %v926 = vld [vmem:[%s1 + $0x7c] sm:$0xf]
  %v931 = vunpack.c.l.b16 %v923
  %v932 = vunpack.c.l.b16 %v924
  %v933 = vunpack.c.l.b16 %v925
  %v934 = vunpack.c.l.b16 %v926
  %v935 = vpack.c.b16 %v932, %v931
  %v936 = vpack.c.b16 %v934, %v933
  %v940 = vsel %vm211, %v921, 0
  %v943 = vsel %vm211, %v922, 0
  %945 = vmatpush.bf16.msra.mxu0 0
  %946 = vmatpush.bf16.msra.mxu0 0
  %947 = vmatpush.bf16.msra.mxu0 0
  %948 = vmatpush.bf16.msra.mxu0 0
  %949 = vmatpush.bf16.msra.mxu0 0
  %950 = vmatpush.bf16.msra.mxu0 0
  %951 = vmatpush.bf16.msra.mxu0 %v936
  %952 = vmatpush.bf16.msra.mxu0 %v935
  %953 = vmatmul.bf16.gmra.mxu0 %v940
  %v954 = vpop.f32.mrf.mxu0
  %v955 = vadd.f32 0.0, %v954
  %v956 = vpop.f32.mrf.mxu0
  %v957 = vadd.f32 0.0, %v956
  %958 = vmatmul.bf16.gmra.mxu0 %v943
  %v959 = vpop.f32.mrf.mxu0
  %v960 = vadd.f32 0.0, %v959
  %v961 = vpop.f32.mrf.mxu0
  %v962 = vadd.f32 0.0, %v961
  %963 = vdwg.mxu0
  %v964 = vadd.f32 %v205, %v955
  %v965 = vadd.f32 %v206, %v957
  %v966 = vadd.f32 %v207, %v960
  %v967 = vadd.f32 %v208, %v962
  %v968 = vld [vmem:[%s2 + $0xd] sm:$0x1]
  %v969 = vperm.slane %v968, 0
  %v970 = vadd.f32 %v964, %v969
  %v971 = vadd.f32 %v965, %v969
  %v972 = vadd.f32 %v966, %v969
  %v973 = vadd.f32 %v967, %v969
  %v974 = vld [vmem:[%s2 + $0xe] sm:$0x1]
  %v975 = vld [vmem:[%s2 + $0xf] sm:$0x1]
  %v976 = vsel %vm211, %v970, 0.0
  %977 = vadd.xlane.f32.xlu0 %v976
  %v978 = vpop.xlane.xlu0 %977
  %v979 = vsel %vm211, %v971, 0.0
  %980 = vadd.xlane.f32.xlu0 %v979
  %v981 = vpop.xlane.xlu0 %980
  %v982 = vsel %vm211, %v972, 0.0
  %983 = vadd.xlane.f32.xlu0 %v982
  %v984 = vpop.xlane.xlu0 %983
  %v985 = vsel %vm211, %v973, 0.0
  %986 = vadd.xlane.f32.xlu0 %v985
  %v987 = vpop.xlane.xlu0 %986
  %v988 = vmul.f32 %v978, %v230
  %v989 = vmul.f32 %v981, %v230
  %v990 = vmul.f32 %v984, %v230
  %v991 = vmul.f32 %v987, %v230
  %v992 = vsub.f32 %v970, %v988
  %v993 = vsub.f32 %v971, %v989
  %v994 = vsub.f32 %v972, %v990
  %v995 = vsub.f32 %v973, %v991
  %v996 = vmul.f32 %v992, %v992
  %v997 = vmul.f32 %v993, %v993
  %v998 = vmul.f32 %v994, %v994
  %v999 = vmul.f32 %v995, %v995
  %v1000 = vsel %vm211, %v996, 0.0
  %1001 = vadd.xlane.f32.xlu0 %v1000
  %v1002 = vpop.xlane.xlu0 %1001
  %v1003 = vsel %vm211, %v997, 0.0
  %1004 = vadd.xlane.f32.xlu0 %v1003
  %v1005 = vpop.xlane.xlu0 %1004
  %v1006 = vsel %vm211, %v998, 0.0
  %1007 = vadd.xlane.f32.xlu0 %v1006
  %v1008 = vpop.xlane.xlu0 %1007
  %v1009 = vsel %vm211, %v999, 0.0
  %1010 = vadd.xlane.f32.xlu0 %v1009
  %v1011 = vpop.xlane.xlu0 %1010
  %v1012 = vmul.f32 %v1002, %v230
  %v1013 = vmul.f32 %v1005, %v230
  %v1014 = vmul.f32 %v1008, %v230
  %v1015 = vmul.f32 %v1011, %v230
  %v1016 = vadd.f32 %v1012, 1e-06
  %v1017 = vadd.f32 %v1013, 1e-06
  %v1018 = vadd.f32 %v1014, 1e-06
  %v1019 = vadd.f32 %v1015, 1e-06
  %v1020 = vrsqrt.pop %v1016
  %v1021 = vmul.f32 %v1020, %v1016
  %v1022 = vmul.f32 %v1021, %v1020
  %v1023 = vmul.f32 0.5, %v1022
  %v1024 = vsub.f32 1.5, %v1023
  %v1025 = vmul.f32 %v1020, %v1024
  %vm1026 = vweird.f32 %v1016
  %vm1027 = vweird.f32 %v1020
  %vm1028 = vmor %vm1026, %vm1027
  %v1029 = vsel %vm1028, %v1020, %v1025
  %v1030 = vrsqrt.pop %v1017
  %v1031 = vmul.f32 %v1030, %v1017
  %v1032 = vmul.f32 %v1031, %v1030
  %v1033 = vmul.f32 0.5, %v1032
  %v1034 = vsub.f32 1.5, %v1033
  %v1035 = vmul.f32 %v1030, %v1034
  %vm1036 = vweird.f32 %v1017
  %vm1037 = vweird.f32 %v1030
  %vm1038 = vmor %vm1036, %vm1037
  %v1039 = vsel %vm1038, %v1030, %v1035
  %v1040 = vrsqrt.pop %v1018
  %v1041 = vmul.f32 %v1040, %v1018
  %v1042 = vmul.f32 %v1041, %v1040
  %v1043 = vmul.f32 0.5, %v1042
  %v1044 = vsub.f32 1.5, %v1043
  %v1045 = vmul.f32 %v1040, %v1044
  %vm1046 = vweird.f32 %v1018
  %vm1047 = vweird.f32 %v1040
  %vm1048 = vmor %vm1046, %vm1047
  %v1049 = vsel %vm1048, %v1040, %v1045
  %v1050 = vrsqrt.pop %v1019
  %v1051 = vmul.f32 %v1050, %v1019
  %v1052 = vmul.f32 %v1051, %v1050
  %v1053 = vmul.f32 0.5, %v1052
  %v1054 = vsub.f32 1.5, %v1053
  %v1055 = vmul.f32 %v1050, %v1054
  %vm1056 = vweird.f32 %v1019
  %vm1057 = vweird.f32 %v1050
  %vm1058 = vmor %vm1056, %vm1057
  %v1059 = vsel %vm1058, %v1050, %v1055
  %v1060 = vmul.f32 %v992, %v1029
  %v1061 = vmul.f32 %v993, %v1039
  %v1062 = vmul.f32 %v994, %v1049
  %v1063 = vmul.f32 %v995, %v1059
  %v1064 = vperm.slane %v974, 0
  %v1065 = vmul.f32 %v1060, %v1064
  %v1066 = vmul.f32 %v1061, %v1064
  %v1067 = vmul.f32 %v1062, %v1064
  %v1068 = vmul.f32 %v1063, %v1064
  %v1069 = vperm.slane %v975, 0
  %v1070 = vadd.f32 %v1065, %v1069
  %v1071 = vadd.f32 %v1066, %v1069
  %v1072 = vadd.f32 %v1067, %v1069
  %v1073 = vadd.f32 %v1068, %v1069
  %v1074 = vpack.c.bf16 %v1071, %v1070
  %v1075 = vpack.c.bf16 %v1073, %v1072
  %v1076 = vld [vmem:[%s1 + $0x80] sm:$0xf]
  %v1077 = vld [vmem:[%s1 + $0x84] sm:$0xf]
  %v1078 = vld [vmem:[%s1 + $0x88] sm:$0xf]
  %v1079 = vld [vmem:[%s1 + $0x8c] sm:$0xf]
  %v1080 = vld [vmem:[%s2 + $0x10] sm:$0x1]
  %v1081 = vperm.slane %v1080, 0
  %v1086 = vunpack.c.l.b16 %v1076
  %v1087 = vunpack.c.l.b16 %v1077
  %v1088 = vunpack.c.l.b16 %v1078
  %v1089 = vunpack.c.l.b16 %v1079
  %v1090 = vpack.c.b16 %v1087, %v1086
  %v1091 = vpack.c.b16 %v1089, %v1088
  %v1095 = vsel %vm211, %v1074, 0
  %v1098 = vsel %vm211, %v1075, 0
  %1100 = vmatpush.bf16.msra.mxu0 0
  %1101 = vmatpush.bf16.msra.mxu0 0
  %1102 = vmatpush.bf16.msra.mxu0 0
  %1103 = vmatpush.bf16.msra.mxu0 0
  %1104 = vmatpush.bf16.msra.mxu0 0
  %1105 = vmatpush.bf16.msra.mxu0 0
  %1106 = vmatpush.bf16.msra.mxu0 %v1091
  %1107 = vmatpush.bf16.msra.mxu0 %v1090
  %1108 = vmatmul.bf16.gmra.mxu0 %v1095
  %v1109 = vpop.f32.mrf.mxu0
  %v1110 = vadd.f32 %v1081, %v1109
  %v1111 = vpop.f32.mrf.mxu0
  %v1112 = vadd.f32 %v1081, %v1111
  %1113 = vmatmul.bf16.gmra.mxu0 %v1098
  %v1114 = vpop.f32.mrf.mxu0
  %v1115 = vadd.f32 %v1081, %v1114
  %v1116 = vpop.f32.mrf.mxu0
  %v1117 = vadd.f32 %v1081, %v1116
  %1118 = vdwg.mxu0
  %v1119 = vmul.f32 %v1110, 0.5
  %v1120 = vmul.f32 %v1112, 0.5
  %v1121 = vmul.f32 %v1115, 0.5
  %v1122 = vmul.f32 %v1117, 0.5
  %v1123 = vmul.f32 %v1110, 0.044715
  %v1124 = vmul.f32 %v1112, 0.044715
  %v1125 = vmul.f32 %v1115, 0.044715
  %v1126 = vmul.f32 %v1117, 0.044715
  %v1127 = vmul.f32 %v1123, %v1110
  %v1128 = vmul.f32 %v1124, %v1112
  %v1129 = vmul.f32 %v1125, %v1115
  %v1130 = vmul.f32 %v1126, %v1117
  %v1131 = vmul.f32 %v1127, %v1110
  %v1132 = vmul.f32 %v1128, %v1112
  %v1133 = vmul.f32 %v1129, %v1115
  %v1134 = vmul.f32 %v1130, %v1117
  %v1135 = vadd.f32 %v1110, %v1131
  %v1136 = vadd.f32 %v1112, %v1132
  %v1137 = vadd.f32 %v1115, %v1133
  %v1138 = vadd.f32 %v1117, %v1134
  %v1139 = vmul.f32 %v1135, 0.7978846
  %v1140 = vmul.f32 %v1136, 0.7978846
  %v1141 = vmul.f32 %v1137, 0.7978846
  %v1142 = vmul.f32 %v1138, 0.7978846
  %v1143 = vtanh.pop %v1139
  %v1144 = vtanh.pop %v1140
  %v1145 = vtanh.pop %v1141
  %v1146 = vtanh.pop %v1142
  %v1147 = vadd.f32 %v1143, 1.0
  %v1148 = vadd.f32 %v1144, 1.0
  %v1149 = vadd.f32 %v1145, 1.0
  %v1150 = vadd.f32 %v1146, 1.0
  %v1151 = vmul.f32 %v1119, %v1147
  %v1152 = vmul.f32 %v1120, %v1148
  %v1153 = vmul.f32 %v1121, %v1149
  %v1154 = vmul.f32 %v1122, %v1150
  %v1155 = vpack.c.bf16 %v1152, %v1151
  %v1156 = vpack.c.bf16 %v1154, %v1153
  %v1157 = vld [vmem:[%s1 + $0x90] sm:$0xf]
  %v1158 = vld [vmem:[%s1 + $0x94] sm:$0xf]
  %v1159 = vld [vmem:[%s1 + $0x98] sm:$0xf]
  %v1160 = vld [vmem:[%s1 + $0x9c] sm:$0xf]
  %v1161 = vld [vmem:[%s1 + $0xa0] sm:$0xf]
  %v1162 = vld [vmem:[%s1 + $0xa4] sm:$0xf]
  %v1163 = vld [vmem:[%s1 + $0xa8] sm:$0xf]
  %v1164 = vld [vmem:[%s1 + $0xac] sm:$0xf]
  %v1165 = vld [vmem:[%s1 + $0xb0] sm:$0xf]
  %v1166 = vld [vmem:[%s1 + $0xb4] sm:$0xf]
  %v1167 = vld [vmem:[%s1 + $0xb8] sm:$0xf]
  %v1168 = vld [vmem:[%s1 + $0xbc] sm:$0xf]
  %v1169 = vld [vmem:[%s1 + $0xc0] sm:$0xf]
  %v1170 = vld [vmem:[%s1 + $0xc4] sm:$0xf]
  %v1171 = vld [vmem:[%s1 + $0xc8] sm:$0xf]
  %v1172 = vld [vmem:[%s1 + $0xcc] sm:$0xf]
  %v1189 = vunpack.c.l.b16 %v1157
  %v1190 = vunpack.c.l.b16 %v1158
  %v1191 = vunpack.c.l.b16 %v1159
  %v1192 = vunpack.c.l.b16 %v1160
  %v1193 = vunpack.c.l.b16 %v1161
  %v1194 = vunpack.c.l.b16 %v1162
  %v1195 = vunpack.c.l.b16 %v1163
  %v1196 = vunpack.c.l.b16 %v1164
  %v1197 = vunpack.c.l.b16 %v1165
  %v1198 = vunpack.c.l.b16 %v1166
  %v1199 = vunpack.c.l.b16 %v1167
  %v1200 = vunpack.c.l.b16 %v1168
  %v1201 = vunpack.c.l.b16 %v1169
  %v1202 = vunpack.c.l.b16 %v1170
  %v1203 = vunpack.c.l.b16 %v1171
  %v1204 = vunpack.c.l.b16 %v1172
  %v1205 = vpack.c.b16 %v1190, %v1189
  %v1206 = vpack.c.b16 %v1192, %v1191
  %v1207 = vpack.c.b16 %v1194, %v1193
  %v1208 = vpack.c.b16 %v1196, %v1195
  %v1209 = vpack.c.b16 %v1198, %v1197
  %v1210 = vpack.c.b16 %v1200, %v1199
  %v1211 = vpack.c.b16 %v1202, %v1201
  %v1212 = vpack.c.b16 %v1204, %v1203
  %1221 = vmatpush.bf16.msra.mxu0 %v1212
  %1222 = vmatpush.bf16.msra.mxu0 %v1211
  %1223 = vmatpush.bf16.msra.mxu0 %v1210
  %1224 = vmatpush.bf16.msra.mxu0 %v1209
  %1225 = vmatpush.bf16.msra.mxu0 %v1208
  %1226 = vmatpush.bf16.msra.mxu0 %v1207
  %1227 = vmatpush.bf16.msra.mxu0 %v1206
  %1228 = vmatpush.bf16.msra.mxu0 %v1205
  %1229 = vmatmul.bf16.gmra.mxu0 %v1155
  %v1230 = vpop.f32.mrf.mxu0
  %v1231 = vadd.f32 0.0, %v1230
  %v1232 = vpop.f32.mrf.mxu0
  %v1233 = vadd.f32 0.0, %v1232
  %1234 = vmatmul.bf16.gmra.mxu0 %v1156
  %v1235 = vpop.f32.mrf.mxu0
  %v1236 = vadd.f32 0.0, %v1235
  %v1237 = vpop.f32.mrf.mxu0
  %v1238 = vadd.f32 0.0, %v1237
  %1239 = vdwg.mxu0
  %v1240 = vadd.f32 %v970, %v1231
  %v1241 = vadd.f32 %v971, %v1233
  %v1242 = vadd.f32 %v972, %v1236
  %v1243 = vadd.f32 %v973, %v1238
  %v1244 = vld [vmem:[%s2 + $0x11] sm:$0x1]
  %v1245 = vperm.slane %v1244, 0
  %v1246 = vadd.f32 %v1240, %v1245
  %v1247 = vadd.f32 %v1241, %v1245
  %v1248 = vadd.f32 %v1242, %v1245
  %v1249 = vadd.f32 %v1243, %v1245
  %v1250 = vld [vmem:[%s2 + $0x12] sm:$0x1]
  %v1251 = vld [vmem:[%s2 + $0x13] sm:$0x1]
  %v1252 = vsel %vm211, %v1246, 0.0
  %1253 = vadd.xlane.f32.xlu0 %v1252
  %v1254 = vpop.xlane.xlu0 %1253
  %v1255 = vsel %vm211, %v1247, 0.0
  %1256 = vadd.xlane.f32.xlu0 %v1255
  %v1257 = vpop.xlane.xlu0 %1256
  %v1258 = vsel %vm211, %v1248, 0.0
  %1259 = vadd.xlane.f32.xlu0 %v1258
  %v1260 = vpop.xlane.xlu0 %1259
  %v1261 = vsel %vm211, %v1249, 0.0
  %1262 = vadd.xlane.f32.xlu0 %v1261
  %v1263 = vpop.xlane.xlu0 %1262
  %v1264 = vmul.f32 %v1254, %v230
  %v1265 = vmul.f32 %v1257, %v230
  %v1266 = vmul.f32 %v1260, %v230
  %v1267 = vmul.f32 %v1263, %v230
  %v1268 = vsub.f32 %v1246, %v1264
  %v1269 = vsub.f32 %v1247, %v1265
  %v1270 = vsub.f32 %v1248, %v1266
  %v1271 = vsub.f32 %v1249, %v1267
  %v1272 = vmul.f32 %v1268, %v1268
  %v1273 = vmul.f32 %v1269, %v1269
  %v1274 = vmul.f32 %v1270, %v1270
  %v1275 = vmul.f32 %v1271, %v1271
  %v1276 = vsel %vm211, %v1272, 0.0
  %1277 = vadd.xlane.f32.xlu0 %v1276
  %v1278 = vpop.xlane.xlu0 %1277
  %v1279 = vsel %vm211, %v1273, 0.0
  %1280 = vadd.xlane.f32.xlu0 %v1279
  %v1281 = vpop.xlane.xlu0 %1280
  %v1282 = vsel %vm211, %v1274, 0.0
  %1283 = vadd.xlane.f32.xlu0 %v1282
  %v1284 = vpop.xlane.xlu0 %1283
  %v1285 = vsel %vm211, %v1275, 0.0
  %1286 = vadd.xlane.f32.xlu0 %v1285
  %v1287 = vpop.xlane.xlu0 %1286
  %v1288 = vmul.f32 %v1278, %v230
  %v1289 = vmul.f32 %v1281, %v230
  %v1290 = vmul.f32 %v1284, %v230
  %v1291 = vmul.f32 %v1287, %v230
  %v1292 = vadd.f32 %v1288, 1e-06
  %v1293 = vadd.f32 %v1289, 1e-06
  %v1294 = vadd.f32 %v1290, 1e-06
  %v1295 = vadd.f32 %v1291, 1e-06
  %v1296 = vrsqrt.pop %v1292
  %v1297 = vmul.f32 %v1296, %v1292
  %v1298 = vmul.f32 %v1297, %v1296
  %v1299 = vmul.f32 0.5, %v1298
  %v1300 = vsub.f32 1.5, %v1299
  %v1301 = vmul.f32 %v1296, %v1300
  %vm1302 = vweird.f32 %v1292
  %vm1303 = vweird.f32 %v1296
  %vm1304 = vmor %vm1302, %vm1303
  %v1305 = vsel %vm1304, %v1296, %v1301
  %v1306 = vrsqrt.pop %v1293
  %v1307 = vmul.f32 %v1306, %v1293
  %v1308 = vmul.f32 %v1307, %v1306
  %v1309 = vmul.f32 0.5, %v1308
  %v1310 = vsub.f32 1.5, %v1309
  %v1311 = vmul.f32 %v1306, %v1310
  %vm1312 = vweird.f32 %v1293
  %vm1313 = vweird.f32 %v1306
  %vm1314 = vmor %vm1312, %vm1313
  %v1315 = vsel %vm1314, %v1306, %v1311
  %v1316 = vrsqrt.pop %v1294
  %v1317 = vmul.f32 %v1316, %v1294
  %v1318 = vmul.f32 %v1317, %v1316
  %v1319 = vmul.f32 0.5, %v1318
  %v1320 = vsub.f32 1.5, %v1319
  %v1321 = vmul.f32 %v1316, %v1320
  %vm1322 = vweird.f32 %v1294
  %vm1323 = vweird.f32 %v1316
  %vm1324 = vmor %vm1322, %vm1323
  %v1325 = vsel %vm1324, %v1316, %v1321
  %v1326 = vrsqrt.pop %v1295
  %v1327 = vmul.f32 %v1326, %v1295
  %v1328 = vmul.f32 %v1327, %v1326
  %v1329 = vmul.f32 0.5, %v1328
  %v1330 = vsub.f32 1.5, %v1329
  %v1331 = vmul.f32 %v1326, %v1330
  %vm1332 = vweird.f32 %v1295
  %vm1333 = vweird.f32 %v1326
  %vm1334 = vmor %vm1332, %vm1333
  %v1335 = vsel %vm1334, %v1326, %v1331
  %v1336 = vmul.f32 %v1268, %v1305
  %v1337 = vmul.f32 %v1269, %v1315
  %v1338 = vmul.f32 %v1270, %v1325
  %v1339 = vmul.f32 %v1271, %v1335
  %v1340 = vperm.slane %v1250, 0
  %v1341 = vmul.f32 %v1336, %v1340
  %v1342 = vmul.f32 %v1337, %v1340
  %v1343 = vmul.f32 %v1338, %v1340
  %v1344 = vmul.f32 %v1339, %v1340
  %v1345 = vperm.slane %v1251, 0
  %v1346 = vadd.f32 %v1341, %v1345
  %v1347 = vadd.f32 %v1342, %v1345
  %v1348 = vadd.f32 %v1343, %v1345
  %v1349 = vadd.f32 %v1344, %v1345
  %v1350 = vpack.c.bf16 %v1347, %v1346
  %v1351 = vpack.c.bf16 %v1349, %v1348
  %v1352 = vld [vmem:[%s1 + $0xd0] sm:$0xf]
  %v1353 = vld [vmem:[%s1 + $0xd4] sm:$0xf]
  %v1354 = vld [vmem:[%s1 + $0xd8] sm:$0xf]
  %v1355 = vld [vmem:[%s1 + $0xdc] sm:$0xf]
  %v1356 = vld [vmem:[%s2 + $0x14] sm:$0x1]
  %v1357 = vperm.slane %v1356, 0
  %v1362 = vunpack.c.l.b16 %v1352
  %v1363 = vunpack.c.l.b16 %v1353
  %v1364 = vunpack.c.l.b16 %v1354
  %v1365 = vunpack.c.l.b16 %v1355
  %v1366 = vpack.c.b16 %v1363, %v1362
  %v1367 = vpack.c.b16 %v1365, %v1364
  %v1371 = vsel %vm211, %v1350, 0
  %v1374 = vsel %vm211, %v1351, 0
  %1376 = vmatpush.bf16.msra.mxu0 0
  %1377 = vmatpush.bf16.msra.mxu0 0
  %1378 = vmatpush.bf16.msra.mxu0 0
  %1379 = vmatpush.bf16.msra.mxu0 0
  %1380 = vmatpush.bf16.msra.mxu0 0
  %1381 = vmatpush.bf16.msra.mxu0 0
  %1382 = vmatpush.bf16.msra.mxu0 %v1367
  %1383 = vmatpush.bf16.msra.mxu0 %v1366
  %1384 = vmatmul.bf16.gmra.mxu0 %v1371
  %v1385 = vpop.f32.mrf.mxu0
  %v1386 = vadd.f32 %v1357, %v1385
  %v1387 = vpop.f32.mrf.mxu0
  %v1388 = vadd.f32 %v1357, %v1387
  %1389 = vmatmul.bf16.gmra.mxu0 %v1374
  %v1390 = vpop.f32.mrf.mxu0
  %v1391 = vadd.f32 %v1357, %v1390
  %v1392 = vpop.f32.mrf.mxu0
  %v1393 = vadd.f32 %v1357, %v1392
  %1394 = vdwg.mxu0
  %v1395 = vpack.c.bf16 %v1388, %v1386
  %v1396 = vpack.c.bf16 %v1393, %v1391
  %1399 = vrot.lane.b32.xlu0 %v1395, 96
  %v1400 = vpop.permute.xlu0 %1399
  %1401 = vrot.lane.b32.xlu0 %v1396, 96
  %v1402 = vpop.permute.xlu0 %1401
  %v1404 = vsel %vm370, %v1395, 0
  %v1407 = vsel %vm370, %v1396, 0
  %v1410 = vsel %vm370, %v1400, 0
  %v1413 = vsel %vm370, %v1402, 0
  %1415 = vmatpush.bf16.xpose.msra.mxu0 0
  %1416 = vmatpush.bf16.xpose.msra.mxu0 0
  %1417 = vmatpush.bf16.xpose.msra.mxu0 0
  %1418 = vmatpush.bf16.xpose.msra.mxu0 0
  %1419 = vmatpush.bf16.xpose.msra.mxu0 0
  %1420 = vmatpush.bf16.xpose.msra.mxu0 0
  %1421 = vmatpush.bf16.xpose.msra.mxu0 %v1413
  %1422 = vmatpush.bf16.xpose.msra.mxu0 %v1410
  %1423 = vmatmul.bf16.gmra.mxu0 %v1404
  %v1424 = vpop.f32.mrf.mxu0
  %v1425 = vadd.f32 0.0, %v1424
  %v1426 = vpop.f32.mrf.mxu0
  %v1427 = vadd.f32 0.0, %v1426
  %1428 = vmatmul.bf16.gmra.mxu0 %v1407
  %v1429 = vpop.f32.mrf.mxu0
  %v1430 = vadd.f32 0.0, %v1429
  %v1431 = vpop.f32.mrf.mxu0
  %v1432 = vadd.f32 0.0, %v1431
  %1433 = vdwg.mxu0
  %v1434 = vmul.f32 %v1425, 0.35355338
  %v1435 = vmul.f32 %v1427, 0.35355338
  %v1436 = vmul.f32 %v1430, 0.35355338
  %v1437 = vmul.f32 %v1432, 0.35355338
  %v1438 = vadd.f32 %v1434, %v37
  %v1439 = vadd.f32 %v1435, %v38
  %v1440 = vadd.f32 %v1436, %v39
  %v1441 = vadd.f32 %v1437, %v40
  %v1442 = vsel %vm211, %v1438, -inf
  %1443 = vmax.xlane.f32.xlu0 %v1442
  %v1444 = vpop.xlane.xlu0 %1443
  %v1445 = vsel %vm211, %v1439, -inf
  %1446 = vmax.xlane.f32.xlu0 %v1445
  %v1447 = vpop.xlane.xlu0 %1446
  %v1448 = vsel %vm211, %v1440, -inf
  %1449 = vmax.xlane.f32.xlu0 %v1448
  %v1450 = vpop.xlane.xlu0 %1449
  %v1451 = vsel %vm211, %v1441, -inf
  %1452 = vmax.xlane.f32.xlu0 %v1451
  %v1453 = vpop.xlane.xlu0 %1452
  %v1454 = vsub.f32 %v1438, %v1444
  %v1455 = vsub.f32 %v1439, %v1447
  %v1456 = vsub.f32 %v1440, %v1450
  %v1457 = vsub.f32 %v1441, %v1453
  %v1458 = vmul.f32 %v1454, 1.442695
  %v1459 = vpow.pop %v1458
  %v1460 = vmul.f32 %v1455, 1.442695
  %v1461 = vpow.pop %v1460
  %v1462 = vmul.f32 %v1456, 1.442695
  %v1463 = vpow.pop %v1462
  %v1464 = vmul.f32 %v1457, 1.442695
  %v1465 = vpow.pop %v1464
  %v1466 = vsel %vm211, %v1459, 0.0
  %1467 = vadd.xlane.f32.xlu0 %v1466
  %v1468 = vpop.xlane.xlu0 %1467
  %v1469 = vsel %vm211, %v1461, 0.0
  %1470 = vadd.xlane.f32.xlu0 %v1469
  %v1471 = vpop.xlane.xlu0 %1470
  %v1472 = vsel %vm211, %v1463, 0.0
  %1473 = vadd.xlane.f32.xlu0 %v1472
  %v1474 = vpop.xlane.xlu0 %1473
  %v1475 = vsel %vm211, %v1465, 0.0
  %1476 = vadd.xlane.f32.xlu0 %v1475
  %v1477 = vpop.xlane.xlu0 %1476
  %v1478 = vrcp.pop %v1468
  %v1479 = vrcp.pop %v1471
  %v1480 = vrcp.pop %v1474
  %v1481 = vrcp.pop %v1477
  %v1482 = vmul.f32 %v1459, %v1478
  %v1483 = vmul.f32 %v1461, %v1479
  %v1484 = vmul.f32 %v1463, %v1480
  %v1485 = vmul.f32 %v1465, %v1481
  %v1486 = vpack.c.bf16 %v1483, %v1482
  %v1487 = vpack.c.bf16 %v1485, %v1484
  %1488 = vrot.lane.b32.xlu0 %v1395, 64
  %v1489 = vpop.permute.xlu0 %1488
  %1490 = vrot.lane.b32.xlu0 %v1396, 64
  %v1491 = vpop.permute.xlu0 %1490
  %v1495 = vsel %vm211, %v1486, 0
  %v1498 = vsel %vm211, %v1487, 0
  %1500 = vmatpush.bf16.msra.mxu0 0
  %1501 = vmatpush.bf16.msra.mxu0 0
  %1502 = vmatpush.bf16.msra.mxu0 0
  %1503 = vmatpush.bf16.msra.mxu0 0
  %1504 = vmatpush.bf16.msra.mxu0 0
  %1505 = vmatpush.bf16.msra.mxu0 0
  %1506 = vmatpush.bf16.msra.mxu0 %v1491
  %1507 = vmatpush.bf16.msra.mxu0 %v1489
  %1508 = vmatmul.bf16.gmra.mxu0 %v1495
  %v1509 = vpop.f32.mrf.mxu0
  %v1510 = vadd.f32 0.0, %v1509
  %v1511 = vpop.f32.mrf.mxu0
  %v1512 = vadd.f32 0.0, %v1511
  %1513 = vmatmul.bf16.gmra.mxu0 %v1498
  %v1514 = vpop.f32.mrf.mxu0
  %v1515 = vadd.f32 0.0, %v1514
  %v1516 = vpop.f32.mrf.mxu0
  %v1517 = vadd.f32 0.0, %v1516
  %1518 = vdwg.mxu0
  %1519 = vrot.lane.b32.xlu0 %v1395, 120
  %v1520 = vpop.permute.xlu0 %1519
  %1521 = vrot.lane.b32.xlu0 %v1396, 120
  %v1522 = vpop.permute.xlu0 %1521
  %1523 = vrot.lane.b32.xlu0 %v1395, 88
  %v1524 = vpop.permute.xlu0 %1523
  %1525 = vrot.lane.b32.xlu0 %v1396, 88
  %v1526 = vpop.permute.xlu0 %1525
  %v1528 = vsel %vm370, %v1520, 0
  %v1531 = vsel %vm370, %v1522, 0
  %v1534 = vsel %vm370, %v1524, 0
  %v1537 = vsel %vm370, %v1526, 0
  %1539 = vmatpush.bf16.xpose.msra.mxu0 0
  %1540 = vmatpush.bf16.xpose.msra.mxu0 0
  %1541 = vmatpush.bf16.xpose.msra.mxu0 0
  %1542 = vmatpush.bf16.xpose.msra.mxu0 0
  %1543 = vmatpush.bf16.xpose.msra.mxu0 0
  %1544 = vmatpush.bf16.xpose.msra.mxu0 0
  %1545 = vmatpush.bf16.xpose.msra.mxu0 %v1537
  %1546 = vmatpush.bf16.xpose.msra.mxu0 %v1534
  %1547 = vmatmul.bf16.gmra.mxu0 %v1528
  %v1548 = vpop.f32.mrf.mxu0
  %v1549 = vadd.f32 0.0, %v1548
  %v1550 = vpop.f32.mrf.mxu0
  %v1551 = vadd.f32 0.0, %v1550
  %1552 = vmatmul.bf16.gmra.mxu0 %v1531
  %v1553 = vpop.f32.mrf.mxu0
  %v1554 = vadd.f32 0.0, %v1553
  %v1555 = vpop.f32.mrf.mxu0
  %v1556 = vadd.f32 0.0, %v1555
  %1557 = vdwg.mxu0
  %v1558 = vmul.f32 %v1549, 0.35355338
  %v1559 = vmul.f32 %v1551, 0.35355338
  %v1560 = vmul.f32 %v1554, 0.35355338
  %v1561 = vmul.f32 %v1556, 0.35355338
  %v1562 = vadd.f32 %v1558, %v37
  %v1563 = vadd.f32 %v1559, %v38
  %v1564 = vadd.f32 %v1560, %v39
  %v1565 = vadd.f32 %v1561, %v40
  %v1566 = vsel %vm211, %v1562, -inf
  %1567 = vmax.xlane.f32.xlu0 %v1566
  %v1568 = vpop.xlane.xlu0 %1567
  %v1569 = vsel %vm211, %v1563, -inf
  %1570 = vmax.xlane.f32.xlu0 %v1569
  %v1571 = vpop.xlane.xlu0 %1570
  %v1572 = vsel %vm211, %v1564, -inf
  %1573 = vmax.xlane.f32.xlu0 %v1572
  %v1574 = vpop.xlane.xlu0 %1573
  %v1575 = vsel %vm211, %v1565, -inf
  %1576 = vmax.xlane.f32.xlu0 %v1575
  %v1577 = vpop.xlane.xlu0 %1576
  %v1578 = vsub.f32 %v1562, %v1568
  %v1579 = vsub.f32 %v1563, %v1571
  %v1580 = vsub.f32 %v1564, %v1574
  %v1581 = vsub.f32 %v1565, %v1577
  %v1582 = vmul.f32 %v1578, 1.442695
  %v1583 = vpow.pop %v1582
  %v1584 = vmul.f32 %v1579, 1.442695
  %v1585 = vpow.pop %v1584
  %v1586 = vmul.f32 %v1580, 1.442695
  %v1587 = vpow.pop %v1586
  %v1588 = vmul.f32 %v1581, 1.442695
  %v1589 = vpow.pop %v1588
  %v1590 = vsel %vm211, %v1583, 0.0
  %1591 = vadd.xlane.f32.xlu0 %v1590
  %v1592 = vpop.xlane.xlu0 %1591
  %v1593 = vsel %vm211, %v1585, 0.0
  %1594 = vadd.xlane.f32.xlu0 %v1593
  %v1595 = vpop.xlane.xlu0 %1594
  %v1596 = vsel %vm211, %v1587, 0.0
  %1597 = vadd.xlane.f32.xlu0 %v1596
  %v1598 = vpop.xlane.xlu0 %1597
  %v1599 = vsel %vm211, %v1589, 0.0
  %1600 = vadd.xlane.f32.xlu0 %v1599
  %v1601 = vpop.xlane.xlu0 %1600
  %v1602 = vrcp.pop %v1592
  %v1603 = vrcp.pop %v1595
  %v1604 = vrcp.pop %v1598
  %v1605 = vrcp.pop %v1601
  %v1606 = vmul.f32 %v1583, %v1602
  %v1607 = vmul.f32 %v1585, %v1603
  %v1608 = vmul.f32 %v1587, %v1604
  %v1609 = vmul.f32 %v1589, %v1605
  %v1610 = vpack.c.bf16 %v1607, %v1606
  %v1611 = vpack.c.bf16 %v1609, %v1608
  %1612 = vrot.lane.b32.xlu0 %v1395, 56
  %v1613 = vpop.permute.xlu0 %1612
  %1614 = vrot.lane.b32.xlu0 %v1396, 56
  %v1615 = vpop.permute.xlu0 %1614
  %v1619 = vsel %vm211, %v1610, 0
  %v1622 = vsel %vm211, %v1611, 0
  %1624 = vmatpush.bf16.msra.mxu0 0
  %1625 = vmatpush.bf16.msra.mxu0 0
  %1626 = vmatpush.bf16.msra.mxu0 0
  %1627 = vmatpush.bf16.msra.mxu0 0
  %1628 = vmatpush.bf16.msra.mxu0 0
  %1629 = vmatpush.bf16.msra.mxu0 0
  %1630 = vmatpush.bf16.msra.mxu0 %v1615
  %1631 = vmatpush.bf16.msra.mxu0 %v1613
  %1632 = vmatmul.bf16.gmra.mxu0 %v1619
  %v1633 = vpop.f32.mrf.mxu0
  %v1634 = vadd.f32 0.0, %v1633
  %v1635 = vpop.f32.mrf.mxu0
  %v1636 = vadd.f32 0.0, %v1635
  %1637 = vmatmul.bf16.gmra.mxu0 %v1622
  %v1638 = vpop.f32.mrf.mxu0
  %v1639 = vadd.f32 0.0, %v1638
  %v1640 = vpop.f32.mrf.mxu0
  %v1641 = vadd.f32 0.0, %v1640
  %1642 = vdwg.mxu0
  %1643 = vrot.lane.b32.xlu0 %v1395, 112
  %v1644 = vpop.permute.xlu0 %1643
  %1645 = vrot.lane.b32.xlu0 %v1396, 112
  %v1646 = vpop.permute.xlu0 %1645
  %1647 = vrot.lane.b32.xlu0 %v1395, 80
  %v1648 = vpop.permute.xlu0 %1647
  %1649 = vrot.lane.b32.xlu0 %v1396, 80
  %v1650 = vpop.permute.xlu0 %1649
  %v1652 = vsel %vm370, %v1644, 0
  %v1655 = vsel %vm370, %v1646, 0
  %v1658 = vsel %vm370, %v1648, 0
  %v1661 = vsel %vm370, %v1650, 0
  %1663 = vmatpush.bf16.xpose.msra.mxu0 0
  %1664 = vmatpush.bf16.xpose.msra.mxu0 0
  %1665 = vmatpush.bf16.xpose.msra.mxu0 0
  %1666 = vmatpush.bf16.xpose.msra.mxu0 0
  %1667 = vmatpush.bf16.xpose.msra.mxu0 0
  %1668 = vmatpush.bf16.xpose.msra.mxu0 0
  %1669 = vmatpush.bf16.xpose.msra.mxu0 %v1661
  %1670 = vmatpush.bf16.xpose.msra.mxu0 %v1658
  %1671 = vmatmul.bf16.gmra.mxu0 %v1652
  %v1672 = vpop.f32.mrf.mxu0
  %v1673 = vadd.f32 0.0, %v1672
  %v1674 = vpop.f32.mrf.mxu0
  %v1675 = vadd.f32 0.0, %v1674
  %1676 = vmatmul.bf16.gmra.mxu0 %v1655
  %v1677 = vpop.f32.mrf.mxu0
  %v1678 = vadd.f32 0.0, %v1677
  %v1679 = vpop.f32.mrf.mxu0
  %v1680 = vadd.f32 0.0, %v1679
  %1681 = vdwg.mxu0
  %v1682 = vmul.f32 %v1673, 0.35355338
  %v1683 = vmul.f32 %v1675, 0.35355338
  %v1684 = vmul.f32 %v1678, 0.35355338
  %v1685 = vmul.f32 %v1680, 0.35355338
  %v1686 = vadd.f32 %v1682, %v37
  %v1687 = vadd.f32 %v1683, %v38
  %v1688 = vadd.f32 %v1684, %v39
  %v1689 = vadd.f32 %v1685, %v40
  %v1690 = vsel %vm211, %v1686, -inf
  %1691 = vmax.xlane.f32.xlu0 %v1690
  %v1692 = vpop.xlane.xlu0 %1691
  %v1693 = vsel %vm211, %v1687, -inf
  %1694 = vmax.xlane.f32.xlu0 %v1693
  %v1695 = vpop.xlane.xlu0 %1694
  %v1696 = vsel %vm211, %v1688, -inf
  %1697 = vmax.xlane.f32.xlu0 %v1696
  %v1698 = vpop.xlane.xlu0 %1697
  %v1699 = vsel %vm211, %v1689, -inf
  %1700 = vmax.xlane.f32.xlu0 %v1699
  %v1701 = vpop.xlane.xlu0 %1700
  %v1702 = vsub.f32 %v1686, %v1692
  %v1703 = vsub.f32 %v1687, %v1695
  %v1704 = vsub.f32 %v1688, %v1698
  %v1705 = vsub.f32 %v1689, %v1701
  %v1706 = vmul.f32 %v1702, 1.442695
  %v1707 = vpow.pop %v1706
  %v1708 = vmul.f32 %v1703, 1.442695
  %v1709 = vpow.pop %v1708
  %v1710 = vmul.f32 %v1704, 1.442695
  %v1711 = vpow.pop %v1710
  %v1712 = vmul.f32 %v1705, 1.442695
  %v1713 = vpow.pop %v1712
  %v1714 = vsel %vm211, %v1707, 0.0
  %1715 = vadd.xlane.f32.xlu0 %v1714
  %v1716 = vpop.xlane.xlu0 %1715
  %v1717 = vsel %vm211, %v1709, 0.0
  %1718 = vadd.xlane.f32.xlu0 %v1717
  %v1719 = vpop.xlane.xlu0 %1718
  %v1720 = vsel %vm211, %v1711, 0.0
  %1721 = vadd.xlane.f32.xlu0 %v1720
  %v1722 = vpop.xlane.xlu0 %1721
  %v1723 = vsel %vm211, %v1713, 0.0
  %1724 = vadd.xlane.f32.xlu0 %v1723
  %v1725 = vpop.xlane.xlu0 %1724
  %v1726 = vrcp.pop %v1716
  %v1727 = vrcp.pop %v1719
  %v1728 = vrcp.pop %v1722
  %v1729 = vrcp.pop %v1725
  %v1730 = vmul.f32 %v1707, %v1726
  %v1731 = vmul.f32 %v1709, %v1727
  %v1732 = vmul.f32 %v1711, %v1728
  %v1733 = vmul.f32 %v1713, %v1729
  %v1734 = vpack.c.bf16 %v1731, %v1730
  %v1735 = vpack.c.bf16 %v1733, %v1732
  %1736 = vrot.lane.b32.xlu0 %v1395, 48
  %v1737 = vpop.permute.xlu0 %1736
  %1738 = vrot.lane.b32.xlu0 %v1396, 48
  %v1739 = vpop.permute.xlu0 %1738
  %v1743 = vsel %vm211, %v1734, 0
  %v1746 = vsel %vm211, %v1735, 0
  %1748 = vmatpush.bf16.msra.mxu0 0
  %1749 = vmatpush.bf16.msra.mxu0 0
  %1750 = vmatpush.bf16.msra.mxu0 0
  %1751 = vmatpush.bf16.msra.mxu0 0
  %1752 = vmatpush.bf16.msra.mxu0 0
  %1753 = vmatpush.bf16.msra.mxu0 0
  %1754 = vmatpush.bf16.msra.mxu0 %v1739
  %1755 = vmatpush.bf16.msra.mxu0 %v1737
  %1756 = vmatmul.bf16.gmra.mxu0 %v1743
  %v1757 = vpop.f32.mrf.mxu0
  %v1758 = vadd.f32 0.0, %v1757
  %v1759 = vpop.f32.mrf.mxu0
  %v1760 = vadd.f32 0.0, %v1759
  %1761 = vmatmul.bf16.gmra.mxu0 %v1746
  %v1762 = vpop.f32.mrf.mxu0
  %v1763 = vadd.f32 0.0, %v1762
  %v1764 = vpop.f32.mrf.mxu0
  %v1765 = vadd.f32 0.0, %v1764
  %1766 = vdwg.mxu0
  %1767 = vrot.lane.b32.xlu0 %v1395, 104
  %v1768 = vpop.permute.xlu0 %1767
  %1769 = vrot.lane.b32.xlu0 %v1396, 104
  %v1770 = vpop.permute.xlu0 %1769
  %1771 = vrot.lane.b32.xlu0 %v1395, 72
  %v1772 = vpop.permute.xlu0 %1771
  %1773 = vrot.lane.b32.xlu0 %v1396, 72
  %v1774 = vpop.permute.xlu0 %1773
  %v1776 = vsel %vm370, %v1768, 0
  %v1779 = vsel %vm370, %v1770, 0
  %v1782 = vsel %vm370, %v1772, 0
  %v1785 = vsel %vm370, %v1774, 0
  %1787 = vmatpush.bf16.xpose.msra.mxu0 0
  %1788 = vmatpush.bf16.xpose.msra.mxu0 0
  %1789 = vmatpush.bf16.xpose.msra.mxu0 0
  %1790 = vmatpush.bf16.xpose.msra.mxu0 0
  %1791 = vmatpush.bf16.xpose.msra.mxu0 0
  %1792 = vmatpush.bf16.xpose.msra.mxu0 0
  %1793 = vmatpush.bf16.xpose.msra.mxu0 %v1785
  %1794 = vmatpush.bf16.xpose.msra.mxu0 %v1782
  %1795 = vmatmul.bf16.gmra.mxu0 %v1776
  %v1796 = vpop.f32.mrf.mxu0
  %v1797 = vadd.f32 0.0, %v1796
  %v1798 = vpop.f32.mrf.mxu0
  %v1799 = vadd.f32 0.0, %v1798
  %1800 = vmatmul.bf16.gmra.mxu0 %v1779
  %v1801 = vpop.f32.mrf.mxu0
  %v1802 = vadd.f32 0.0, %v1801
  %v1803 = vpop.f32.mrf.mxu0
  %v1804 = vadd.f32 0.0, %v1803
  %1805 = vdwg.mxu0
  %v1806 = vmul.f32 %v1797, 0.35355338
  %v1807 = vmul.f32 %v1799, 0.35355338
  %v1808 = vmul.f32 %v1802, 0.35355338
  %v1809 = vmul.f32 %v1804, 0.35355338
  %v1810 = vadd.f32 %v1806, %v37
  %v1811 = vadd.f32 %v1807, %v38
  %v1812 = vadd.f32 %v1808, %v39
  %v1813 = vadd.f32 %v1809, %v40
  %v1814 = vsel %vm211, %v1810, -inf
  %1815 = vmax.xlane.f32.xlu0 %v1814
  %v1816 = vpop.xlane.xlu0 %1815
  %v1817 = vsel %vm211, %v1811, -inf
  %1818 = vmax.xlane.f32.xlu0 %v1817
  %v1819 = vpop.xlane.xlu0 %1818
  %v1820 = vsel %vm211, %v1812, -inf
  %1821 = vmax.xlane.f32.xlu0 %v1820
  %v1822 = vpop.xlane.xlu0 %1821
  %v1823 = vsel %vm211, %v1813, -inf
  %1824 = vmax.xlane.f32.xlu0 %v1823
  %v1825 = vpop.xlane.xlu0 %1824
  %v1826 = vsub.f32 %v1810, %v1816
  %v1827 = vsub.f32 %v1811, %v1819
  %v1828 = vsub.f32 %v1812, %v1822
  %v1829 = vsub.f32 %v1813, %v1825
  %v1830 = vmul.f32 %v1826, 1.442695
  %v1831 = vpow.pop %v1830
  %v1832 = vmul.f32 %v1827, 1.442695
  %v1833 = vpow.pop %v1832
  %v1834 = vmul.f32 %v1828, 1.442695
  %v1835 = vpow.pop %v1834
  %v1836 = vmul.f32 %v1829, 1.442695
  %v1837 = vpow.pop %v1836
  %v1838 = vsel %vm211, %v1831, 0.0
  %1839 = vadd.xlane.f32.xlu0 %v1838
  %v1840 = vpop.xlane.xlu0 %1839
  %v1841 = vsel %vm211, %v1833, 0.0
  %1842 = vadd.xlane.f32.xlu0 %v1841
  %v1843 = vpop.xlane.xlu0 %1842
  %v1844 = vsel %vm211, %v1835, 0.0
  %1845 = vadd.xlane.f32.xlu0 %v1844
  %v1846 = vpop.xlane.xlu0 %1845
  %v1847 = vsel %vm211, %v1837, 0.0
  %1848 = vadd.xlane.f32.xlu0 %v1847
  %v1849 = vpop.xlane.xlu0 %1848
  %v1850 = vrcp.pop %v1840
  %v1851 = vrcp.pop %v1843
  %v1852 = vrcp.pop %v1846
  %v1853 = vrcp.pop %v1849
  %v1854 = vmul.f32 %v1831, %v1850
  %v1855 = vmul.f32 %v1833, %v1851
  %v1856 = vmul.f32 %v1835, %v1852
  %v1857 = vmul.f32 %v1837, %v1853
  %v1858 = vpack.c.bf16 %v1855, %v1854
  %v1859 = vpack.c.bf16 %v1857, %v1856
  %1860 = vrot.lane.b32.xlu0 %v1395, 40
  %v1861 = vpop.permute.xlu0 %1860
  %1862 = vrot.lane.b32.xlu0 %v1396, 40
  %v1863 = vpop.permute.xlu0 %1862
  %v1867 = vsel %vm211, %v1858, 0
  %v1870 = vsel %vm211, %v1859, 0
  %1872 = vmatpush.bf16.msra.mxu0 0
  %1873 = vmatpush.bf16.msra.mxu0 0
  %1874 = vmatpush.bf16.msra.mxu0 0
  %1875 = vmatpush.bf16.msra.mxu0 0
  %1876 = vmatpush.bf16.msra.mxu0 0
  %1877 = vmatpush.bf16.msra.mxu0 0
  %1878 = vmatpush.bf16.msra.mxu0 %v1863
  %1879 = vmatpush.bf16.msra.mxu0 %v1861
  %1880 = vmatmul.bf16.gmra.mxu0 %v1867
  %v1881 = vpop.f32.mrf.mxu0
  %v1882 = vadd.f32 0.0, %v1881
  %v1883 = vpop.f32.mrf.mxu0
  %v1884 = vadd.f32 0.0, %v1883
  %1885 = vmatmul.bf16.gmra.mxu0 %v1870
  %v1886 = vpop.f32.mrf.mxu0
  %v1887 = vadd.f32 0.0, %v1886
  %v1888 = vpop.f32.mrf.mxu0
  %v1889 = vadd.f32 0.0, %v1888
  %1890 = vdwg.mxu0
  %1895 = vrot.lane.b32.xlu0 %v1634, 8
  %v1896 = vpop.permute.xlu0 %1895
  %1897 = vrot.lane.b32.xlu0 %v1636, 8
  %v1898 = vpop.permute.xlu0 %1897
  %1899 = vrot.lane.b32.xlu0 %v1639, 8
  %v1900 = vpop.permute.xlu0 %1899
  %1901 = vrot.lane.b32.xlu0 %v1641, 8
  %v1902 = vpop.permute.xlu0 %1901
  %1911 = vrot.lane.b32.xlu0 %v1758, 16
  %v1912 = vpop.permute.xlu0 %1911
  %1913 = vrot.lane.b32.xlu0 %v1760, 16
  %v1914 = vpop.permute.xlu0 %1913
  %1915 = vrot.lane.b32.xlu0 %v1763, 16
  %v1916 = vpop.permute.xlu0 %1915
  %1917 = vrot.lane.b32.xlu0 %v1765, 16
  %v1918 = vpop.permute.xlu0 %1917
  %1927 = vrot.lane.b32.xlu0 %v1882, 24
  %v1928 = vpop.permute.xlu0 %1927
  %1929 = vrot.lane.b32.xlu0 %v1884, 24
  %v1930 = vpop.permute.xlu0 %1929
  %1931 = vrot.lane.b32.xlu0 %v1887, 24
  %v1932 = vpop.permute.xlu0 %1931
  %1933 = vrot.lane.b32.xlu0 %v1889, 24
  %v1934 = vpop.permute.xlu0 %1933
  %v1939 = vsel %vm370, %v1510, %v1896
  %v1940 = vsel %vm370, %v1512, %v1898
  %v1941 = vsel %vm370, %v1515, %v1900
  %v1942 = vsel %vm370, %v1517, %v1902
  %v1943 = vsel %vm911, %v1939, %v1912
  %v1944 = vsel %vm911, %v1940, %v1914
  %v1945 = vsel %vm911, %v1941, %v1916
  %v1946 = vsel %vm911, %v1942, %v1918
  %v1947 = vsel %vm916, %v1943, %v1928
  %v1948 = vsel %vm916, %v1944, %v1930
  %v1949 = vsel %vm916, %v1945, %v1932
  %v1950 = vsel %vm916, %v1946, %v1934
  %v1951 = vpack.c.bf16 %v1948, %v1947
  %v1952 = vpack.c.bf16 %v1950, %v1949
  %v1953 = vld [vmem:[%s1 + $0xe0] sm:$0xf]
  %v1954 = vld [vmem:[%s1 + $0xe4] sm:$0xf]
  %v1955 = vld [vmem:[%s1 + $0xe8] sm:$0xf]
  %v1956 = vld [vmem:[%s1 + $0xec] sm:$0xf]
  %v1961 = vunpack.c.l.b16 %v1953
  %v1962 = vunpack.c.l.b16 %v1954
  %v1963 = vunpack.c.l.b16 %v1955
  %v1964 = vunpack.c.l.b16 %v1956
  %v1965 = vpack.c.b16 %v1962, %v1961
  %v1966 = vpack.c.b16 %v1964, %v1963
  %v1970 = vsel %vm211, %v1951, 0
  %v1973 = vsel %vm211, %v1952, 0
  %1975 = vmatpush.bf16.msra.mxu0 0
  %1976 = vmatpush.bf16.msra.mxu0 0
  %1977 = vmatpush.bf16.msra.mxu0 0
  %1978 = vmatpush.bf16.msra.mxu0 0
  %1979 = vmatpush.bf16.msra.mxu0 0
  %1980 = vmatpush.bf16.msra.mxu0 0
  %1981 = vmatpush.bf16.msra.mxu0 %v1966
  %1982 = vmatpush.bf16.msra.mxu0 %v1965
  %1983 = vmatmul.bf16.gmra.mxu0 %v1970
  %v1984 = vpop.f32.mrf.mxu0
  %v1985 = vadd.f32 0.0, %v1984
  %v1986 = vpop.f32.mrf.mxu0
  %v1987 = vadd.f32 0.0, %v1986
  %1988 = vmatmul.bf16.gmra.mxu0 %v1973
  %v1989 = vpop.f32.mrf.mxu0
  %v1990 = vadd.f32 0.0, %v1989
  %v1991 = vpop.f32.mrf.mxu0
  %v1992 = vadd.f32 0.0, %v1991
  %1993 = vdwg.mxu0
  %v1994 = vadd.f32 %v1246, %v1985
  %v1995 = vadd.f32 %v1247, %v1987
  %v1996 = vadd.f32 %v1248, %v1990
  %v1997 = vadd.f32 %v1249, %v1992
  %v1998 = vld [vmem:[%s2 + $0x15] sm:$0x1]
  %v1999 = vperm.slane %v1998, 0
  %v2000 = vadd.f32 %v1994, %v1999
  %v2001 = vadd.f32 %v1995, %v1999
  %v2002 = vadd.f32 %v1996, %v1999
  %v2003 = vadd.f32 %v1997, %v1999
  %v2004 = vld [vmem:[%s2 + $0x16] sm:$0x1]
  %v2005 = vld [vmem:[%s2 + $0x17] sm:$0x1]
  %v2006 = vsel %vm211, %v2000, 0.0
  %2007 = vadd.xlane.f32.xlu0 %v2006
  %v2008 = vpop.xlane.xlu0 %2007
  %v2009 = vsel %vm211, %v2001, 0.0
  %2010 = vadd.xlane.f32.xlu0 %v2009
  %v2011 = vpop.xlane.xlu0 %2010
  %v2012 = vsel %vm211, %v2002, 0.0
  %2013 = vadd.xlane.f32.xlu0 %v2012
  %v2014 = vpop.xlane.xlu0 %2013
  %v2015 = vsel %vm211, %v2003, 0.0
  %2016 = vadd.xlane.f32.xlu0 %v2015
  %v2017 = vpop.xlane.xlu0 %2016
  %v2018 = vmul.f32 %v2008, %v230
  %v2019 = vmul.f32 %v2011, %v230
  %v2020 = vmul.f32 %v2014, %v230
  %v2021 = vmul.f32 %v2017, %v230
  %v2022 = vsub.f32 %v2000, %v2018
  %v2023 = vsub.f32 %v2001, %v2019
  %v2024 = vsub.f32 %v2002, %v2020
  %v2025 = vsub.f32 %v2003, %v2021
  %v2026 = vmul.f32 %v2022, %v2022
  %v2027 = vmul.f32 %v2023, %v2023
  %v2028 = vmul.f32 %v2024, %v2024
  %v2029 = vmul.f32 %v2025, %v2025
  %v2030 = vsel %vm211, %v2026, 0.0
  %2031 = vadd.xlane.f32.xlu0 %v2030
  %v2032 = vpop.xlane.xlu0 %2031
  %v2033 = vsel %vm211, %v2027, 0.0
  %2034 = vadd.xlane.f32.xlu0 %v2033
  %v2035 = vpop.xlane.xlu0 %2034
  %v2036 = vsel %vm211, %v2028, 0.0
  %2037 = vadd.xlane.f32.xlu0 %v2036
  %v2038 = vpop.xlane.xlu0 %2037
  %v2039 = vsel %vm211, %v2029, 0.0
  %2040 = vadd.xlane.f32.xlu0 %v2039
  %v2041 = vpop.xlane.xlu0 %2040
  %v2042 = vmul.f32 %v2032, %v230
  %v2043 = vmul.f32 %v2035, %v230
  %v2044 = vmul.f32 %v2038, %v230
  %v2045 = vmul.f32 %v2041, %v230
  %v2046 = vadd.f32 %v2042, 1e-06
  %v2047 = vadd.f32 %v2043, 1e-06
  %v2048 = vadd.f32 %v2044, 1e-06
  %v2049 = vadd.f32 %v2045, 1e-06
  %v2050 = vrsqrt.pop %v2046
  %v2051 = vmul.f32 %v2050, %v2046
  %v2052 = vmul.f32 %v2051, %v2050
  %v2053 = vmul.f32 0.5, %v2052
  %v2054 = vsub.f32 1.5, %v2053
  %v2055 = vmul.f32 %v2050, %v2054
  %vm2056 = vweird.f32 %v2046
  %vm2057 = vweird.f32 %v2050
  %vm2058 = vmor %vm2056, %vm2057
  %v2059 = vsel %vm2058, %v2050, %v2055
  %v2060 = vrsqrt.pop %v2047
  %v2061 = vmul.f32 %v2060, %v2047
  %v2062 = vmul.f32 %v2061, %v2060
  %v2063 = vmul.f32 0.5, %v2062
  %v2064 = vsub.f32 1.5, %v2063
  %v2065 = vmul.f32 %v2060, %v2064
  %vm2066 = vweird.f32 %v2047
  %vm2067 = vweird.f32 %v2060
  %vm2068 = vmor %vm2066, %vm2067
  %v2069 = vsel %vm2068, %v2060, %v2065
  %v2070 = vrsqrt.pop %v2048
  %v2071 = vmul.f32 %v2070, %v2048
  %v2072 = vmul.f32 %v2071, %v2070
  %v2073 = vmul.f32 0.5, %v2072
  %v2074 = vsub.f32 1.5, %v2073
  %v2075 = vmul.f32 %v2070, %v2074
  %vm2076 = vweird.f32 %v2048
  %vm2077 = vweird.f32 %v2070
  %vm2078 = vmor %vm2076, %vm2077
  %v2079 = vsel %vm2078, %v2070, %v2075
  %v2080 = vrsqrt.pop %v2049
  %v2081 = vmul.f32 %v2080, %v2049
  %v2082 = vmul.f32 %v2081, %v2080
  %v2083 = vmul.f32 0.5, %v2082
  %v2084 = vsub.f32 1.5, %v2083
  %v2085 = vmul.f32 %v2080, %v2084
  %vm2086 = vweird.f32 %v2049
  %vm2087 = vweird.f32 %v2080
  %vm2088 = vmor %vm2086, %vm2087
  %v2089 = vsel %vm2088, %v2080, %v2085
  %v2090 = vmul.f32 %v2022, %v2059
  %v2091 = vmul.f32 %v2023, %v2069
  %v2092 = vmul.f32 %v2024, %v2079
  %v2093 = vmul.f32 %v2025, %v2089
  %v2094 = vperm.slane %v2004, 0
  %v2095 = vmul.f32 %v2090, %v2094
  %v2096 = vmul.f32 %v2091, %v2094
  %v2097 = vmul.f32 %v2092, %v2094
  %v2098 = vmul.f32 %v2093, %v2094
  %v2099 = vperm.slane %v2005, 0
  %v2100 = vadd.f32 %v2095, %v2099
  %v2101 = vadd.f32 %v2096, %v2099
  %v2102 = vadd.f32 %v2097, %v2099
  %v2103 = vadd.f32 %v2098, %v2099
  %v2104 = vpack.c.bf16 %v2101, %v2100
  %v2105 = vpack.c.bf16 %v2103, %v2102
  %v2106 = vld [vmem:[%s1 + $0xf0] sm:$0xf]
  %v2107 = vld [vmem:[%s1 + $0xf4] sm:$0xf]
  %v2108 = vld [vmem:[%s1 + $0xf8] sm:$0xf]
  %v2109 = vld [vmem:[%s1 + $0xfc] sm:$0xf]
  %v2110 = vld [vmem:[%s2 + $0x18] sm:$0x1]
  %v2111 = vperm.slane %v2110, 0
  %v2116 = vunpack.c.l.b16 %v2106
  %v2117 = vunpack.c.l.b16 %v2107
  %v2118 = vunpack.c.l.b16 %v2108
  %v2119 = vunpack.c.l.b16 %v2109
  %v2120 = vpack.c.b16 %v2117, %v2116
  %v2121 = vpack.c.b16 %v2119, %v2118
  %v2125 = vsel %vm211, %v2104, 0
  %v2128 = vsel %vm211, %v2105, 0
  %2130 = vmatpush.bf16.msra.mxu0 0
  %2131 = vmatpush.bf16.msra.mxu0 0
  %2132 = vmatpush.bf16.msra.mxu0 0
  %2133 = vmatpush.bf16.msra.mxu0 0
  %2134 = vmatpush.bf16.msra.mxu0 0
  %2135 = vmatpush.bf16.msra.mxu0 0
  %2136 = vmatpush.bf16.msra.mxu0 %v2121
  %2137 = vmatpush.bf16.msra.mxu0 %v2120
  %2138 = vmatmul.bf16.gmra.mxu0 %v2125
  %v2139 = vpop.f32.mrf.mxu0
  %v2140 = vadd.f32 %v2111, %v2139
  %v2141 = vpop.f32.mrf.mxu0
  %v2142 = vadd.f32 %v2111, %v2141
  %2143 = vmatmul.bf16.gmra.mxu0 %v2128
  %v2144 = vpop.f32.mrf.mxu0
  %v2145 = vadd.f32 %v2111, %v2144
  %v2146 = vpop.f32.mrf.mxu0
  %v2147 = vadd.f32 %v2111, %v2146
  %2148 = vdwg.mxu0
  %v2149 = vmul.f32 %v2140, 0.5
  %v2150 = vmul.f32 %v2142, 0.5
  %v2151 = vmul.f32 %v2145, 0.5
  %v2152 = vmul.f32 %v2147, 0.5
  %v2153 = vmul.f32 %v2140, 0.044715
  %v2154 = vmul.f32 %v2142, 0.044715
  %v2155 = vmul.f32 %v2145, 0.044715
  %v2156 = vmul.f32 %v2147, 0.044715
  %v2157 = vmul.f32 %v2153, %v2140
  %v2158 = vmul.f32 %v2154, %v2142
  %v2159 = vmul.f32 %v2155, %v2145
  %v2160 = vmul.f32 %v2156, %v2147
  %v2161 = vmul.f32 %v2157, %v2140
  %v2162 = vmul.f32 %v2158, %v2142
  %v2163 = vmul.f32 %v2159, %v2145
  %v2164 = vmul.f32 %v2160, %v2147
  %v2165 = vadd.f32 %v2140, %v2161
  %v2166 = vadd.f32 %v2142, %v2162
  %v2167 = vadd.f32 %v2145, %v2163
  %v2168 = vadd.f32 %v2147, %v2164
  %v2169 = vmul.f32 %v2165, 0.7978846
  %v2170 = vmul.f32 %v2166, 0.7978846
  %v2171 = vmul.f32 %v2167, 0.7978846
  %v2172 = vmul.f32 %v2168, 0.7978846
  %v2173 = vtanh.pop %v2169
  %v2174 = vtanh.pop %v2170
  %v2175 = vtanh.pop %v2171
  %v2176 = vtanh.pop %v2172
  %v2177 = vadd.f32 %v2173, 1.0
  %v2178 = vadd.f32 %v2174, 1.0
  %v2179 = vadd.f32 %v2175, 1.0
  %v2180 = vadd.f32 %v2176, 1.0
  %v2181 = vmul.f32 %v2149, %v2177
  %v2182 = vmul.f32 %v2150, %v2178
  %v2183 = vmul.f32 %v2151, %v2179
  %v2184 = vmul.f32 %v2152, %v2180
  %v2185 = vpack.c.bf16 %v2182, %v2181
  %v2186 = vpack.c.bf16 %v2184, %v2183
  %v2187 = vld [vmem:[%s1 + $0x100] sm:$0xf]
  %v2188 = vld [vmem:[%s1 + $0x104] sm:$0xf]
  %v2189 = vld [vmem:[%s1 + $0x108] sm:$0xf]
  %v2190 = vld [vmem:[%s1 + $0x10c] sm:$0xf]
  %v2191 = vld [vmem:[%s1 + $0x110] sm:$0xf]
  %v2192 = vld [vmem:[%s1 + $0x114] sm:$0xf]
  %v2193 = vld [vmem:[%s1 + $0x118] sm:$0xf]
  %v2194 = vld [vmem:[%s1 + $0x11c] sm:$0xf]
  %v2195 = vld [vmem:[%s1 + $0x120] sm:$0xf]
  %v2196 = vld [vmem:[%s1 + $0x124] sm:$0xf]
  %v2197 = vld [vmem:[%s1 + $0x128] sm:$0xf]
  %v2198 = vld [vmem:[%s1 + $0x12c] sm:$0xf]
  %v2199 = vld [vmem:[%s1 + $0x130] sm:$0xf]
  %v2200 = vld [vmem:[%s1 + $0x134] sm:$0xf]
  %v2201 = vld [vmem:[%s1 + $0x138] sm:$0xf]
  %v2202 = vld [vmem:[%s1 + $0x13c] sm:$0xf]
  %v2219 = vunpack.c.l.b16 %v2187
  %v2220 = vunpack.c.l.b16 %v2188
  %v2221 = vunpack.c.l.b16 %v2189
  %v2222 = vunpack.c.l.b16 %v2190
  %v2223 = vunpack.c.l.b16 %v2191
  %v2224 = vunpack.c.l.b16 %v2192
  %v2225 = vunpack.c.l.b16 %v2193
  %v2226 = vunpack.c.l.b16 %v2194
  %v2227 = vunpack.c.l.b16 %v2195
  %v2228 = vunpack.c.l.b16 %v2196
  %v2229 = vunpack.c.l.b16 %v2197
  %v2230 = vunpack.c.l.b16 %v2198
  %v2231 = vunpack.c.l.b16 %v2199
  %v2232 = vunpack.c.l.b16 %v2200
  %v2233 = vunpack.c.l.b16 %v2201
  %v2234 = vunpack.c.l.b16 %v2202
  %v2235 = vpack.c.b16 %v2220, %v2219
  %v2236 = vpack.c.b16 %v2222, %v2221
  %v2237 = vpack.c.b16 %v2224, %v2223
  %v2238 = vpack.c.b16 %v2226, %v2225
  %v2239 = vpack.c.b16 %v2228, %v2227
  %v2240 = vpack.c.b16 %v2230, %v2229
  %v2241 = vpack.c.b16 %v2232, %v2231
  %v2242 = vpack.c.b16 %v2234, %v2233
  %2251 = vmatpush.bf16.msra.mxu0 %v2242
  %2252 = vmatpush.bf16.msra.mxu0 %v2241
  %2253 = vmatpush.bf16.msra.mxu0 %v2240
  %2254 = vmatpush.bf16.msra.mxu0 %v2239
  %2255 = vmatpush.bf16.msra.mxu0 %v2238
  %2256 = vmatpush.bf16.msra.mxu0 %v2237
  %2257 = vmatpush.bf16.msra.mxu0 %v2236
  %2258 = vmatpush.bf16.msra.mxu0 %v2235
  %2259 = vmatmul.bf16.gmra.mxu0 %v2185
  %v2260 = vpop.f32.mrf.mxu0
  %v2261 = vadd.f32 0.0, %v2260
  %v2262 = vpop.f32.mrf.mxu0
  %v2263 = vadd.f32 0.0, %v2262
  %2264 = vmatmul.bf16.gmra.mxu0 %v2186
  %v2265 = vpop.f32.mrf.mxu0
  %v2266 = vadd.f32 0.0, %v2265
  %v2267 = vpop.f32.mrf.mxu0
  %v2268 = vadd.f32 0.0, %v2267
  %2269 = vdwg.mxu0
  %v2270 = vadd.f32 %v2000, %v2261
  %v2271 = vadd.f32 %v2001, %v2263
  %v2272 = vadd.f32 %v2002, %v2266
  %v2273 = vadd.f32 %v2003, %v2268
  %v2274 = vld [vmem:[%s2 + $0x19] sm:$0x1]
  %v2275 = vperm.slane %v2274, 0
  %v2276 = vadd.f32 %v2270, %v2275
  %v2277 = vadd.f32 %v2271, %v2275
  %v2278 = vadd.f32 %v2272, %v2275
  %v2279 = vadd.f32 %v2273, %v2275
  %v2280 = vld [vmem:[%s2 + $0x8] sm:$0x1]
  %v2281 = vld [vmem:[%s2 + $0x9] sm:$0x1]
  %v2286 = vrot.slane %v2277, 7
  %vm2287 = vcmask 1041409
  %v2288 = vsel %vm2287, %v2286, %v2276
  %v2289 = vrot.slane %v2278, 6
  %vm2290 = vcmask 1042434
  %v2291 = vsel %vm2290, %v2289, %v2288
  %v2292 = vrot.slane %v2279, 5
  %vm2293 = vcmask 1043459
  %v2294 = vsel %vm2293, %v2292, %v2291
  %vm2296 = vcmask 257024
  %v2297 = vsel %vm2296, %v2294, 0.0
  %2298 = vadd.xlane.f32.xlu0 %v2297
  %v2299 = vpop.xlane.xlu0 %2298
  %v2300 = vmul.f32 %v2299, %v230
  %v2302 = vrot.slane %v2300, 1
  %v2303 = vrot.slane %v2300, 2
  %v2304 = vrot.slane %v2300, 3
  %v2309 = vsub.f32 %v2276, %v2300
  %v2310 = vsub.f32 %v2277, %v2302
  %v2311 = vsub.f32 %v2278, %v2303
  %v2312 = vsub.f32 %v2279, %v2304
  %v2313 = vmul.f32 %v2309, %v2309
  %v2314 = vmul.f32 %v2310, %v2310
  %v2315 = vmul.f32 %v2311, %v2311
  %v2316 = vmul.f32 %v2312, %v2312
  %v2321 = vrot.slane %v2314, 7
  %v2322 = vsel %vm2287, %v2321, %v2313
  %v2323 = vrot.slane %v2315, 6
  %v2324 = vsel %vm2290, %v2323, %v2322
  %v2325 = vrot.slane %v2316, 5
  %v2326 = vsel %vm2293, %v2325, %v2324
  %v2328 = vsel %vm2296, %v2326, 0.0
  %2329 = vadd.xlane.f32.xlu0 %v2328
  %v2330 = vpop.xlane.xlu0 %2329
  %v2331 = vmul.f32 %v2330, %v230
  %v2332 = vadd.f32 %v2331, 1e-06
  %v2333 = vrsqrt.pop %v2332
  %v2334 = vmul.f32 %v2333, %v2332
  %v2335 = vmul.f32 %v2334, %v2333
  %v2336 = vmul.f32 0.5, %v2335
  %v2337 = vsub.f32 1.5, %v2336
  %v2338 = vmul.f32 %v2333, %v2337
  %vm2339 = vweird.f32 %v2332
  %vm2340 = vweird.f32 %v2333
  %vm2341 = vmor %vm2339, %vm2340
  %v2342 = vsel %vm2341, %v2333, %v2338
  %v2344 = vrot.slane %v2342, 1
  %v2345 = vrot.slane %v2342, 2
  %v2346 = vrot.slane %v2342, 3
  %v2351 = vmul.f32 %v2309, %v2342
  %v2352 = vmul.f32 %v2310, %v2344
  %v2353 = vmul.f32 %v2311, %v2345
  %v2354 = vmul.f32 %v2312, %v2346
  %v2355 = vperm.slane %v2280, 0
  %v2356 = vmul.f32 %v2351, %v2355
  %v2357 = vmul.f32 %v2352, %v2355
  %v2358 = vmul.f32 %v2353, %v2355
  %v2359 = vmul.f32 %v2354, %v2355
  %v2360 = vperm.slane %v2281, 0
  %v2361 = vadd.f32 %v2356, %v2360
  %v2362 = vadd.f32 %v2357, %v2360
  %v2363 = vadd.f32 %v2358, %v2360
  %v2364 = vadd.f32 %v2359, %v2360
  %v2369 = vrot.slane %v2362, 7
  %v2370 = vsel %vm2287, %v2369, %v2361
  %v2371 = vrot.slane %v2363, 6
  %v2372 = vsel %vm2290, %v2371, %v2370
  %v2373 = vrot.slane %v2364, 5
  %v2374 = vsel %vm2293, %v2373, %v2372
  %2376 = vst.msk [vmem:[%s3] sm:$0xf] %vm2296, %v2374
  // Predicated region
  $region14: #{vit_feat.1} parent=0 // pred_check
    _
  $region15: #{vit_feat.1} parent=0 // pred_check_branch
    %2378 = sbr.rel (0) target = $region17
  $region16: #{vit_feat.1} parent=0 // pred_region
    _
  $region17: #{vit_feat.1} parent=0 // pred_fallthru
    _
  // Predicated region
  $region18: #{vit_feat.1} parent=0 // pred_check
    _
  $region19: #{vit_feat.1} parent=0 // pred_check_branch
    %2380 = sbr.rel (0) target = $region21
  $region20: #{vit_feat.1} parent=0 // pred_region
    _
  $region21: #{vit_feat.1} parent=0 // pred_fallthru
    _

</llo_original>
